<compile_context>
chip_gen: v7x
topology: tpu7x:2x2x1
jax: 0.10.0
libtpu: 0.0.40
codegen_flags: <defaults>
</compile_context>

<pallas_src>
import jax
import jax.numpy as jnp
from jax.experimental import pallas as pl
from jax.experimental.pallas import tpu as pltpu


def make_fused_ode_kernel(num_f, num_g, hf0):
    """Fused kernel computing both MLPs of NeuralODE on one batch tile of x.

    Ref layout:
      x,
      w0_packed, b0_packed,                         # shared packed first layer
      fw1, fb1, ..., fw_{num_f-1}, fb_{num_f-1},    # remaining f layers
      gw1, gb1, ..., gw_{num_g-1}, gb_{num_g-1},    # remaining g layers
      f_out, g_out
    """

    def kernel(*refs):
        x_ref = refs[0]
        w0_ref, b0_ref = refs[1], refs[2]
        f_rest = refs[3 : 3 + 2 * (num_f - 1)]
        g_rest = refs[3 + 2 * (num_f - 1) : 3 + 2 * (num_f - 1) + 2 * (num_g - 1)]
        f_out_ref, g_out_ref = refs[-2], refs[-1]

        x = x_ref[...]

        # Packed first layer of both nets: one MXU push instead of two.
        h0 = jnp.maximum(
            jnp.dot(x, w0_ref[...], preferred_element_type=jnp.float32) + b0_ref[...],
            0.0,
        )
        h_f = h0[:, :hf0]   # lane-aligned slice (hf0 is a multiple of 128)
        h_g = h0[:, hf0:]

        # Remaining f layers (ReLU after every layer, incl. the last — build_mlp default).
        for i in range(num_f - 1):
            w = f_rest[2 * i][...]
            b = f_rest[2 * i + 1][...]
            h_f = jnp.maximum(
                jnp.dot(h_f, w, preferred_element_type=jnp.float32) + b, 0.0
            )
        f_out_ref[...] = h_f.astype(f_out_ref.dtype)

        # Remaining g layers.
        for i in range(num_g - 1):
            w = g_rest[2 * i][...]
            b = g_rest[2 * i + 1][...]
            h_g = jnp.maximum(
                jnp.dot(h_g, w, preferred_element_type=jnp.float32) + b, 0.0
            )
        g_out_ref[...] = h_g.astype(g_out_ref.dtype)

    return kernel


def prepare_fused_params(f_params, g_params):
    """Pack layer-0 of ode_f/ode_g column-wise and reshape biases to (1, out).

    Done once at parameter-setup time so the per-call path does no reshapes or
    concatenations.
    """
    fw, fb = f_params
    gw, gb = g_params
    assert fw[0].shape[0] == gw[0].shape[0], "ode_f and ode_g share the same input x"

    w0 = jnp.concatenate([fw[0], gw[0]], axis=1)                 # (in, hf0 + hg0)
    b0 = jnp.concatenate([fb[0], gb[0]], axis=0).reshape(1, -1)  # (1, hf0 + hg0)

    rest_f = []
    for w, b in zip(fw[1:], fb[1:]):
        rest_f += [w, b.reshape(1, -1)]
    rest_g = []
    for w, b in zip(gw[1:], gb[1:]):
        rest_g += [w, b.reshape(1, -1)]

    meta = dict(
        num_f=len(fw),
        num_g=len(gw),
        hf0=fw[0].shape[1],
        f_out=fw[-1].shape[1],
        g_out=gw[-1].shape[1],
    )
    return (w0, b0, *rest_f, *rest_g), meta


def neural_ode_forward(x, fused_params, meta, *, block_b=8):
    """Pallas equivalent of NeuralODE.forward: returns (ode_f(x), ode_g(x))."""
    batch, in_dim = x.shape
    num_f, num_g = meta["num_f"], meta["num_g"]
    f_out, g_out = meta["f_out"], meta["g_out"]

    # Batch tile: multiple of 8 sublanes, must evenly tile the batch; otherwise fall
    # back to processing the whole batch in one grid step (block == full dim is legal).
    block_b = min(block_b, batch)
    if block_b % 8 != 0 or batch % block_b != 0:
        block_b = batch
    grid = (batch // block_b,)

    # x and the outputs are tiled over the batch axis; every weight/bias block is the
    # whole array with a constant index_map -> stays VMEM-resident across grid steps.
    const = lambda i: (0, 0)
    in_specs = [pl.BlockSpec((block_b, in_dim), lambda i: (i, 0))]
    in_specs += [pl.BlockSpec(p.shape, const) for p in fused_params]
    out_specs = (
        pl.BlockSpec((block_b, f_out), lambda i: (i, 0)),
        pl.BlockSpec((block_b, g_out), lambda i: (i, 0)),
    )

    kernel = make_fused_ode_kernel(num_f, num_g, meta["hf0"])
    return pl.pallas_call(
        kernel,
        out_shape=(
            jax.ShapeDtypeStruct((batch, f_out), x.dtype),
            jax.ShapeDtypeStruct((batch, g_out), x.dtype),
        ),
        grid=grid,
        in_specs=in_specs,
        out_specs=out_specs,
        compiler_params=pltpu.CompilerParams(
            dimension_semantics=("parallel",),
        ),
    )(x, *fused_params)


def init_mlp_params(key, hidden_dims, dtype=jnp.float32):
    """Deterministic PyTorch-Linear-style init: U(-1/sqrt(fan_in), 1/sqrt(fan_in))."""
    weights, biases = [], []
    for i in range(len(hidden_dims) - 1):
        fan_in, fan_out = hidden_dims[i], hidden_dims[i + 1]
        key, kw, kb = jax.random.split(key, 3)
        bound = float(1.0 / (fan_in ** 0.5))
        weights.append(jax.random.uniform(kw, (fan_in, fan_out), dtype, -bound, bound))
        biases.append(jax.random.uniform(kb, (fan_out,), dtype, -bound, bound))
    return weights, biases


def mlp_reference(x, weights, biases):
    """Plain-JAX build_mlp reference: Linear + ReLU after every layer."""
    h = x
    for w, b in zip(weights, biases):
        h = jnp.maximum(h @ w + b, 0.0)
    return h


if __name__ == "__main__":
    key = jax.random.PRNGKey(0)
    k_x, k_f, k_g = jax.random.split(key, 3)

    # Scaled-down shapes consistent with InDCBFController's NeuralODE:
    #   params_f = [latent, h, h, latent], params_g = [latent, h, h, latent * n_control]
    # (module defaults latent=256, h=1024; scaled to 128/256 to stay small while keeping
    #  every feature dim a multiple of 128 -> lane-dense stores).
    n_control = 2
    latent_dim = 128
    h_dim = 256
    batch = 16

    params_f = [latent_dim, h_dim, h_dim, latent_dim]
    params_g = [latent_dim, h_dim, h_dim, latent_dim * n_control]

    x = jax.random.normal(k_x, (batch, latent_dim), dtype=jnp.float32)
    f_params = init_mlp_params(k_f, params_f)
    g_params = init_mlp_params(k_g, params_g)

    fused_params, meta = prepare_fused_params(f_params, g_params)

    out_f, out_g = neural_ode_forward(x, fused_params, meta, block_b=8)
    out_f = jax.block_until_ready(out_f)
    out_g = jax.block_until_ready(out_g)

    # Correctness check against the plain-JAX reference of the PyTorch module.
    ref_f = mlp_reference(x, *f_params)
    ref_g = mlp_reference(x, *g_params)
    assert out_f.shape == (batch, params_f[-1])
    assert out_g.shape == (batch, params_g[-1])
    assert jnp.allclose(out_f, ref_f, atol=1e-5, rtol=1e-5)
    assert jnp.allclose(out_g, ref_g, atol=1e-5, rtol=1e-5)

    print("KERNEL_OK")
</pallas_src>

<mosaic_0001>
module attributes {stable_mosaic.version = 11 : i64} {
  func.func @kernel(%arg0: i32, %arg1: memref<8x128xf32, #tpu.memory_space<vmem>>, %arg2: memref<128x512xf32, #tpu.memory_space<vmem>>, %arg3: memref<1x512xf32, #tpu.memory_space<vmem>>, %arg4: memref<256x256xf32, #tpu.memory_space<vmem>>, %arg5: memref<1x256xf32, #tpu.memory_space<vmem>>, %arg6: memref<256x128xf32, #tpu.memory_space<vmem>>, %arg7: memref<1x128xf32, #tpu.memory_space<vmem>>, %arg8: memref<256x256xf32, #tpu.memory_space<vmem>>, %arg9: memref<1x256xf32, #tpu.memory_space<vmem>>, %arg10: memref<256x256xf32, #tpu.memory_space<vmem>>, %arg11: memref<1x256xf32, #tpu.memory_space<vmem>>, %arg12: memref<8x128xf32, #tpu.memory_space<vmem>>, %arg13: memref<8x256xf32, #tpu.memory_space<vmem>>) attributes {dimension_semantics = [#tpu.dimension_semantics<parallel>], iteration_bounds = array<i64: 2>, scalar_prefetch = 0 : i64, scratch_operands = 0 : i64, tpu.core_type = #tpu.core_type<tc>, window_params = [{transform_indices = @transform_0, window_bounds = array<i64: 8, 128>}, {pipeline_mode = #tpu.pipeline_mode<synchronous>, transform_indices = @transform_1, window_bounds = array<i64: 128, 512>}, {pipeline_mode = #tpu.pipeline_mode<synchronous>, transform_indices = @transform_2, window_bounds = array<i64: 1, 512>}, {pipeline_mode = #tpu.pipeline_mode<synchronous>, transform_indices = @transform_3, window_bounds = array<i64: 256, 256>}, {pipeline_mode = #tpu.pipeline_mode<synchronous>, transform_indices = @transform_4, window_bounds = array<i64: 1, 256>}, {pipeline_mode = #tpu.pipeline_mode<synchronous>, transform_indices = @transform_5, window_bounds = array<i64: 256, 128>}, {pipeline_mode = #tpu.pipeline_mode<synchronous>, transform_indices = @transform_6, window_bounds = array<i64: 1, 128>}, {pipeline_mode = #tpu.pipeline_mode<synchronous>, transform_indices = @transform_7, window_bounds = array<i64: 256, 256>}, {pipeline_mode = #tpu.pipeline_mode<synchronous>, transform_indices = @transform_8, window_bounds = array<i64: 1, 256>}, {pipeline_mode = #tpu.pipeline_mode<synchronous>, transform_indices = @transform_9, window_bounds = array<i64: 256, 256>}, {pipeline_mode = #tpu.pipeline_mode<synchronous>, transform_indices = @transform_10, window_bounds = array<i64: 1, 256>}, {transform_indices = @transform_11, window_bounds = array<i64: 8, 128>}, {transform_indices = @transform_12, window_bounds = array<i64: 8, 256>}]} {
    %c0 = arith.constant 0 : index
    %c0_0 = arith.constant 0 : index
    %0 = vector.load %arg1[%c0, %c0_0] : memref<8x128xf32, #tpu.memory_space<vmem>>, vector<8x128xf32>
    %c0_1 = arith.constant 0 : index
    %c0_2 = arith.constant 0 : index
    %1 = vector.load %arg2[%c0_1, %c0_2] : memref<128x512xf32, #tpu.memory_space<vmem>>, vector<128x512xf32>
    %cst = arith.constant dense<0.000000e+00> : vector<8x512xf32>
    %2 = tpu.matmul %0, %1, %cst {dimension_numbers = #tpu.dot_dimension_numbers<[1], [0], [0], [1], [0, 0, 1, 1], [], []>} : vector<8x128xf32>, vector<128x512xf32>, vector<8x512xf32> -> vector<8x512xf32>
    %c0_3 = arith.constant 0 : index
    %c0_4 = arith.constant 0 : index
    %3 = vector.load %arg3[%c0_3, %c0_4] : memref<1x512xf32, #tpu.memory_space<vmem>>, vector<1x512xf32>
    %4 = vector.broadcast %3 : vector<1x512xf32> to vector<8x512xf32>
    %5 = arith.addf %2, %4 : vector<8x512xf32>
    %cst_5 = arith.constant 0.000000e+00 : f32
    %6 = vector.broadcast %cst_5 : f32 to vector<8x512xf32>
    %7 = arith.maximumf %5, %6 : vector<8x512xf32>
    %8 = vector.extract_strided_slice %7 {offsets = [0, 0], sizes = [8, 256], strides = [1, 1]} : vector<8x512xf32> to vector<8x256xf32>
    %9 = vector.extract_strided_slice %7 {offsets = [0, 256], sizes = [8, 256], strides = [1, 1]} : vector<8x512xf32> to vector<8x256xf32>
    %c0_6 = arith.constant 0 : index
    %c0_7 = arith.constant 0 : index
    %10 = vector.load %arg4[%c0_6, %c0_7] : memref<256x256xf32, #tpu.memory_space<vmem>>, vector<256x256xf32>
    %c0_8 = arith.constant 0 : index
    %c0_9 = arith.constant 0 : index
    %11 = vector.load %arg5[%c0_8, %c0_9] : memref<1x256xf32, #tpu.memory_space<vmem>>, vector<1x256xf32>
    %cst_10 = arith.constant dense<0.000000e+00> : vector<8x256xf32>
    %12 = tpu.matmul %8, %10, %cst_10 {dimension_numbers = #tpu.dot_dimension_numbers<[1], [0], [0], [1], [0, 0, 1, 1], [], []>} : vector<8x256xf32>, vector<256x256xf32>, vector<8x256xf32> -> vector<8x256xf32>
    %13 = vector.broadcast %11 : vector<1x256xf32> to vector<8x256xf32>
    %14 = arith.addf %12, %13 : vector<8x256xf32>
    %cst_11 = arith.constant 0.000000e+00 : f32
    %15 = vector.broadcast %cst_11 : f32 to vector<8x256xf32>
    %16 = arith.maximumf %14, %15 : vector<8x256xf32>
    %c0_12 = arith.constant 0 : index
    %c0_13 = arith.constant 0 : index
    %17 = vector.load %arg6[%c0_12, %c0_13] : memref<256x128xf32, #tpu.memory_space<vmem>>, vector<256x128xf32>
    %c0_14 = arith.constant 0 : index
    %c0_15 = arith.constant 0 : index
    %18 = vector.load %arg7[%c0_14, %c0_15] : memref<1x128xf32, #tpu.memory_space<vmem>>, vector<1x128xf32>
    %cst_16 = arith.constant dense<0.000000e+00> : vector<8x128xf32>
    %19 = tpu.matmul %16, %17, %cst_16 {dimension_numbers = #tpu.dot_dimension_numbers<[1], [0], [0], [1], [0, 0, 1, 1], [], []>} : vector<8x256xf32>, vector<256x128xf32>, vector<8x128xf32> -> vector<8x128xf32>
    %20 = vector.broadcast %18 : vector<1x128xf32> to vector<8x128xf32>
    %21 = arith.addf %19, %20 : vector<8x128xf32>
    %cst_17 = arith.constant 0.000000e+00 : f32
    %22 = vector.broadcast %cst_17 : f32 to vector<8x128xf32>
    %23 = arith.maximumf %21, %22 : vector<8x128xf32>
    %c0_18 = arith.constant 0 : index
    %c0_19 = arith.constant 0 : index
    %24 = vector.load %arg12[%c0_18, %c0_19] : memref<8x128xf32, #tpu.memory_space<vmem>>, vector<8x128xf32>
    tpu.vector_store %arg12[%c0_18, %c0_19], %23 {strides = array<i32>} : memref<8x128xf32, #tpu.memory_space<vmem>>, vector<8x128xf32>,
    %c0_20 = arith.constant 0 : index
    %c0_21 = arith.constant 0 : index
    %25 = vector.load %arg8[%c0_20, %c0_21] : memref<256x256xf32, #tpu.memory_space<vmem>>, vector<256x256xf32>
    %c0_22 = arith.constant 0 : index
    %c0_23 = arith.constant 0 : index
    %26 = vector.load %arg9[%c0_22, %c0_23] : memref<1x256xf32, #tpu.memory_space<vmem>>, vector<1x256xf32>
    %cst_24 = arith.constant dense<0.000000e+00> : vector<8x256xf32>
    %27 = tpu.matmul %9, %25, %cst_24 {dimension_numbers = #tpu.dot_dimension_numbers<[1], [0], [0], [1], [0, 0, 1, 1], [], []>} : vector<8x256xf32>, vector<256x256xf32>, vector<8x256xf32> -> vector<8x256xf32>
    %28 = vector.broadcast %26 : vector<1x256xf32> to vector<8x256xf32>
    %29 = arith.addf %27, %28 : vector<8x256xf32>
    %cst_25 = arith.constant 0.000000e+00 : f32
    %30 = vector.broadcast %cst_25 : f32 to vector<8x256xf32>
    %31 = arith.maximumf %29, %30 : vector<8x256xf32>
    %c0_26 = arith.constant 0 : index
    %c0_27 = arith.constant 0 : index
    %32 = vector.load %arg10[%c0_26, %c0_27] : memref<256x256xf32, #tpu.memory_space<vmem>>, vector<256x256xf32>
    %c0_28 = arith.constant 0 : index
    %c0_29 = arith.constant 0 : index
    %33 = vector.load %arg11[%c0_28, %c0_29] : memref<1x256xf32, #tpu.memory_space<vmem>>, vector<1x256xf32>
    %cst_30 = arith.constant dense<0.000000e+00> : vector<8x256xf32>
    %34 = tpu.matmul %31, %32, %cst_30 {dimension_numbers = #tpu.dot_dimension_numbers<[1], [0], [0], [1], [0, 0, 1, 1], [], []>} : vector<8x256xf32>, vector<256x256xf32>, vector<8x256xf32> -> vector<8x256xf32>
    %35 = vector.broadcast %33 : vector<1x256xf32> to vector<8x256xf32>
    %36 = arith.addf %34, %35 : vector<8x256xf32>
    %cst_31 = arith.constant 0.000000e+00 : f32
    %37 = vector.broadcast %cst_31 : f32 to vector<8x256xf32>
    %38 = arith.maximumf %36, %37 : vector<8x256xf32>
    %c0_32 = arith.constant 0 : index
    %c0_33 = arith.constant 0 : index
    %39 = vector.load %arg13[%c0_32, %c0_33] : memref<8x256xf32, #tpu.memory_space<vmem>>, vector<8x256xf32>
    tpu.vector_store %arg13[%c0_32, %c0_33], %38 {strides = array<i32>} : memref<8x256xf32, #tpu.memory_space<vmem>>, vector<8x256xf32>,
    return
  }
  func.func @transform_0(%arg0: i32) -> (i32, i32) {
    %c0_i32 = arith.constant 0 : i32
    %c0_i32_0 = arith.constant 0 : i32
    return %arg0, %c0_i32 : i32, i32
  }
  func.func @transform_1(%arg0: i32) -> (i32, i32) {
    %c0_i32 = arith.constant 0 : i32
    %c0_i32_0 = arith.constant 0 : i32
    %c0_i32_1 = arith.constant 0 : i32
    return %c0_i32, %c0_i32_0 : i32, i32
  }
  func.func @transform_2(%arg0: i32) -> (i32, i32) {
    %c0_i32 = arith.constant 0 : i32
    %c0_i32_0 = arith.constant 0 : i32
    %c0_i32_1 = arith.constant 0 : i32
    return %c0_i32, %c0_i32_0 : i32, i32
  }
  func.func @transform_3(%arg0: i32) -> (i32, i32) {
    %c0_i32 = arith.constant 0 : i32
    %c0_i32_0 = arith.constant 0 : i32
    %c0_i32_1 = arith.constant 0 : i32
    return %c0_i32, %c0_i32_0 : i32, i32
  }
  func.func @transform_4(%arg0: i32) -> (i32, i32) {
    %c0_i32 = arith.constant 0 : i32
    %c0_i32_0 = arith.constant 0 : i32
    %c0_i32_1 = arith.constant 0 : i32
    return %c0_i32, %c0_i32_0 : i32, i32
  }
  func.func @transform_5(%arg0: i32) -> (i32, i32) {
    %c0_i32 = arith.constant 0 : i32
    %c0_i32_0 = arith.constant 0 : i32
    %c0_i32_1 = arith.constant 0 : i32
    return %c0_i32, %c0_i32_0 : i32, i32
  }
  func.func @transform_6(%arg0: i32) -> (i32, i32) {
    %c0_i32 = arith.constant 0 : i32
    %c0_i32_0 = arith.constant 0 : i32
    %c0_i32_1 = arith.constant 0 : i32
    return %c0_i32, %c0_i32_0 : i32, i32
  }
  func.func @transform_7(%arg0: i32) -> (i32, i32) {
    %c0_i32 = arith.constant 0 : i32
    %c0_i32_0 = arith.constant 0 : i32
    %c0_i32_1 = arith.constant 0 : i32
    return %c0_i32, %c0_i32_0 : i32, i32
  }
  func.func @transform_8(%arg0: i32) -> (i32, i32) {
    %c0_i32 = arith.constant 0 : i32
    %c0_i32_0 = arith.constant 0 : i32
    %c0_i32_1 = arith.constant 0 : i32
    return %c0_i32, %c0_i32_0 : i32, i32
  }
  func.func @transform_9(%arg0: i32) -> (i32, i32) {
    %c0_i32 = arith.constant 0 : i32
    %c0_i32_0 = arith.constant 0 : i32
    %c0_i32_1 = arith.constant 0 : i32
    return %c0_i32, %c0_i32_0 : i32, i32
  }
  func.func @transform_10(%arg0: i32) -> (i32, i32) {
    %c0_i32 = arith.constant 0 : i32
    %c0_i32_0 = arith.constant 0 : i32
    %c0_i32_1 = arith.constant 0 : i32
    return %c0_i32, %c0_i32_0 : i32, i32
  }
  func.func @transform_11(%arg0: i32) -> (i32, i32) {
    %c0_i32 = arith.constant 0 : i32
    %c0_i32_0 = arith.constant 0 : i32
    return %arg0, %c0_i32 : i32, i32
  }
  func.func @transform_12(%arg0: i32) -> (i32, i32) {
    %c0_i32 = arith.constant 0 : i32
    %c0_i32_0 = arith.constant 0 : i32
    return %arg0, %c0_i32 : i32, i32
  }
}

</mosaic_0001>

<llo_original>
// kernel: tpu_custom_call.1
$region0: #{tpu_custom_call.1}
  #allocation0 [shape = 'u32[]', space=smem, size = 0x4, offset = 0x4, fixed_abs, tag = 'smem constant byte address 0x4 - core index']
  #allocation1 [shape = 'u32[144,128]{1,0:T(1,128)}', space=vmem, size = 0x12000, scoped, tag = 'internal scratch']
  %s0 = inlined_call_operand.hbm [shape: f32[16,128], index: 0, kind: input, shape index: {}]
  %s1 = inlined_call_operand.hbm [shape: f32[128,512], index: 1, kind: input, shape index: {}]
  %s2 = inlined_call_operand.vmem [shape: f32[1,512], index: 2, kind: input, shape index: {}]
  %s3 = inlined_call_operand.hbm [shape: f32[256,256], index: 3, kind: input, shape index: {}]
  %s4 = inlined_call_operand.vmem [shape: f32[1,256], index: 4, kind: input, shape index: {}]
  %s5 = inlined_call_operand.hbm [shape: f32[256,128], index: 5, kind: input, shape index: {}]
  %s6 = inlined_call_operand.vmem [shape: f32[1,128], index: 6, kind: input, shape index: {}]
  %s7 = inlined_call_operand.hbm [shape: f32[256,256], index: 7, kind: input, shape index: {}]
  %s8 = inlined_call_operand.vmem [shape: f32[1,256], index: 8, kind: input, shape index: {}]
  %s9 = inlined_call_operand.hbm [shape: f32[256,256], index: 9, kind: input, shape index: {}]
  %s10 = inlined_call_operand.vmem [shape: f32[1,256], index: 10, kind: input, shape index: {}]
  %s11 = inlined_call_operand.hbm [shape: f32[16,128], index: 11, kind: output, shape index: {0}]
  %s12 = inlined_call_operand.hbm [shape: f32[16,256], index: 12, kind: output, shape index: {1}]
  %13 = xla_tuple %s11, %s12
  %s14 = sld [smem:[#allocation0]]
  $region109: #{tpu_custom_call.1} parent=0
    _
  %s16 = ssub.s32 1, %s14
  %s17 = scalar_select 0, %s16, %s14
  $region1: #{tpu_custom_call.1} parent=0
    #allocation2 [shape = 'u8[8192]{0}', space=vmem, size = 0x2000, scoped, tag = 'input window, operand 0']
    #allocation3 [shape = 's32[2]{0}', space=sflag, size = 0x8, scoped, tag = 'scoped memory for tpu_custom_call.1']
    #allocation4 [shape = 's32[2]{0}', space=sflag, size = 0x8, scoped, tag = 'scoped memory for tpu_custom_call.1']
    #allocation5 [shape = 'u8[262144]{0}', space=vmem, size = 0x40000, scoped, tag = 'input window, operand 1, single buffered']
    #allocation6 [shape = 's32[1]{0}', space=sflag, size = 0x4, scoped, tag = 'scoped memory for tpu_custom_call.1']
    #allocation7 [shape = 'u8[262144]{0}', space=vmem, size = 0x40000, scoped, tag = 'input window, operand 3, single buffered']
    #allocation8 [shape = 'u8[131072]{0}', space=vmem, size = 0x20000, scoped, tag = 'input window, operand 5, single buffered']
    #allocation9 [shape = 's32[1]{0}', space=sflag, size = 0x4, scoped, tag = 'scoped memory for tpu_custom_call.1']
    #allocation10 [shape = 'u8[262144]{0}', space=vmem, size = 0x40000, scoped, tag = 'input window, operand 7, single buffered']
    #allocation11 [shape = 'u8[262144]{0}', space=vmem, size = 0x40000, scoped, tag = 'input window, operand 9, single buffered']
    #allocation12 [shape = 's32[1]{0}', space=sflag, size = 0x4, scoped, tag = 'scoped memory for tpu_custom_call.1']
    #allocation13 [shape = 'u8[8192]{0}', space=vmem, size = 0x2000, scoped, tag = 'output window, operand 0']
    #allocation14 [shape = 'u8[16384]{0}', space=vmem, size = 0x4000, scoped, tag = 'output window, operand 1']
    #allocation15 [shape = 's32[2]{0}', space=sflag, size = 0x8, scoped, tag = 'scoped memory for tpu_custom_call.1']
    %18 = vsyncpa [#allocation3], 0
    %s19 = scalar_lea.sflag [#allocation3], 1
    %20 = vsyncpa %s19, 0
    %21 = vsyncpa [#allocation6], 0
    %22 = vsyncpa [#allocation9], 0
    %23 = vsyncpa [#allocation12], 0
    %24 = vsyncpa [#allocation4], 0
    %s25 = scalar_lea.sflag [#allocation4], 1
    %26 = vsyncpa %s25, 0
    %27 = vsyncpa [#allocation15], 0
    %s28 = scalar_lea.sflag [#allocation15], 1
    %29 = vsyncpa %s28, 0
    loop: start=0, step=1, limit=4
    $region2: #{tpu_custom_call.1} parent=1 // loop_pre_header
      _
    $region3: #{tpu_custom_call.1} parent=1 // loop_header
      %s31 = sphi 0, %s35
      %p32 = scmp.ge.s32.totalorder %s31, 4
      %s41 = sphi 0, %s43
      %s44 = sphi 0, %s41
      %s45 = sphi 0, %s44
      %s61 = sphi 0, %s45
      %s65 = sphi 0, %s65
      %s67 = sphi 0, %s65
      %s68 = sphi 0, %s67
      %s82 = sphi 0, %s68
      %s86 = sphi 0, %s86
      %s88 = sphi 0, %s86
      %s89 = sphi 0, %s88
      %s103 = sphi 0, %s89
      %s107 = sphi 0, %s107
      %s109 = sphi 0, %s107
      %s110 = sphi 0, %s109
      %s124 = sphi 0, %s110
      %s128 = sphi 0, %s128
      %s130 = sphi 0, %s128
      %s131 = sphi 0, %s130
      %s145 = sphi 0, %s131
      %s149 = sphi 0, %s149
      %s151 = sphi 0, %s149
      %s152 = sphi 0, %s151
      %s166 = sphi 0, %s152
      %s170 = sphi 0, %s170
      %s172 = sphi 0, %s170
      %s173 = sphi 0, %s172
      %s187 = sphi 0, %s173
      %s191 = sphi 0, %s191
      %s193 = sphi 0, %s191
      %s194 = sphi 0, %s193
      %s208 = sphi 0, %s194
      %s212 = sphi 0, %s212
      %s214 = sphi 0, %s212
      %s215 = sphi 0, %s214
      %s229 = sphi 0, %s215
      %s233 = sphi 0, %s233
      %s235 = sphi 0, %s233
      %s236 = sphi 0, %s235
      %s250 = sphi 0, %s236
      %s254 = sphi 0, %s254
      %s256 = sphi 0, %s254
      %s257 = sphi 0, %s256
      %s271 = sphi 0, %s257
      %s277 = sphi 0, %s279
      %s280 = sphi 0, %s277
      %s281 = sphi 0, %s280
      %s297 = sphi 0, %s281
      %s303 = sphi 0, %s305
      %s306 = sphi 0, %s303
      %s307 = sphi 0, %s306
      %s323 = sphi 0, %s307
    $region4: #{tpu_custom_call.1} parent=1 // loop_header_branch
      %34 = sbr.rel (%p32) target = $region8
    $region5: #{tpu_custom_call.1} parent=1 // loop_body
      %s36 = ssub.s32 %s31, 1
      %s37 = ssub.s32 %s31, 2
      %s38 = sadd.s32 %s31, 1
      %s39 = ssub.s32 %s31, %s38
      %p40 = scmp.eq.s32.totalorder %s39, 0
      %s42 = sadd.s32 %s41, 1
      %s43 = scalar_select %p40, %s41, %s42
      %p46 = pneg %p40
      %p47 = scmp.eq.s32.totalorder %s31, 1
      %p48 = por %p46, %p47
      %p49 = scmp.ne.s32.totalorder %s41, %s44
      %p50 = scmp.eq.s32.totalorder %s31, 0
      %p51 = por %p49, %p50
      %p52 = scmp.ne.s32.totalorder %s41, %s44
      %p53 = scmp.eq.s32.totalorder %s36, 1
      %p54 = por %p52, %p53
      %p55 = scmp.ne.s32.totalorder %s44, %s45
      %p56 = scmp.eq.s32.totalorder %s36, 0
      %p57 = por %p55, %p56
      %p58 = scmp.ne.s32.totalorder %s44, %s45
      %p59 = scmp.eq.s32.totalorder %s37, 1
      %p60 = por %p58, %p59
      %p62 = scmp.ne.s32.totalorder %s45, %s61
      %p63 = scmp.eq.s32.totalorder %s37, 0
      %p64 = por %p62, %p63
      %s66 = sadd.s32 %s65, 1
      %p69 = scmp.eq.s32.totalorder %s31, 1
      %p70 = scmp.ne.s32.totalorder %s65, %s67
      %p71 = scmp.eq.s32.totalorder %s31, 0
      %p72 = por %p70, %p71
      %p73 = scmp.ne.s32.totalorder %s65, %s67
      %p74 = scmp.eq.s32.totalorder %s36, 1
      %p75 = por %p73, %p74
      %p76 = scmp.ne.s32.totalorder %s67, %s68
      %p77 = scmp.eq.s32.totalorder %s36, 0
      %p78 = por %p76, %p77
      %p79 = scmp.ne.s32.totalorder %s67, %s68
      %p80 = scmp.eq.s32.totalorder %s37, 1
      %p81 = por %p79, %p80
      %p83 = scmp.ne.s32.totalorder %s68, %s82
      %p84 = scmp.eq.s32.totalorder %s37, 0
      %p85 = por %p83, %p84
      %s87 = sadd.s32 %s86, 1
      %p90 = scmp.eq.s32.totalorder %s31, 1
      %p91 = scmp.ne.s32.totalorder %s86, %s88
      %p92 = scmp.eq.s32.totalorder %s31, 0
      %p93 = por %p91, %p92
      %p94 = scmp.ne.s32.totalorder %s86, %s88
      %p95 = scmp.eq.s32.totalorder %s36, 1
      %p96 = por %p94, %p95
      %p97 = scmp.ne.s32.totalorder %s88, %s89
      %p98 = scmp.eq.s32.totalorder %s36, 0
      %p99 = por %p97, %p98
      %p100 = scmp.ne.s32.totalorder %s88, %s89
      %p101 = scmp.eq.s32.totalorder %s37, 1
      %p102 = por %p100, %p101
      %p104 = scmp.ne.s32.totalorder %s89, %s103
      %p105 = scmp.eq.s32.totalorder %s37, 0
      %p106 = por %p104, %p105
      %s108 = sadd.s32 %s107, 1
      %p111 = scmp.eq.s32.totalorder %s31, 1
      %p112 = scmp.ne.s32.totalorder %s107, %s109
      %p113 = scmp.eq.s32.totalorder %s31, 0
      %p114 = por %p112, %p113
      %p115 = scmp.ne.s32.totalorder %s107, %s109
      %p116 = scmp.eq.s32.totalorder %s36, 1
      %p117 = por %p115, %p116
      %p118 = scmp.ne.s32.totalorder %s109, %s110
      %p119 = scmp.eq.s32.totalorder %s36, 0
      %p120 = por %p118, %p119
      %p121 = scmp.ne.s32.totalorder %s109, %s110
      %p122 = scmp.eq.s32.totalorder %s37, 1
      %p123 = por %p121, %p122
      %p125 = scmp.ne.s32.totalorder %s110, %s124
      %p126 = scmp.eq.s32.totalorder %s37, 0
      %p127 = por %p125, %p126
      %s129 = sadd.s32 %s128, 1
      %p132 = scmp.eq.s32.totalorder %s31, 1
      %p133 = scmp.ne.s32.totalorder %s128, %s130
      %p134 = scmp.eq.s32.totalorder %s31, 0
      %p135 = por %p133, %p134
      %p136 = scmp.ne.s32.totalorder %s128, %s130
      %p137 = scmp.eq.s32.totalorder %s36, 1
      %p138 = por %p136, %p137
      %p139 = scmp.ne.s32.totalorder %s130, %s131
      %p140 = scmp.eq.s32.totalorder %s36, 0
      %p141 = por %p139, %p140
      %p142 = scmp.ne.s32.totalorder %s130, %s131
      %p143 = scmp.eq.s32.totalorder %s37, 1
      %p144 = por %p142, %p143
      %p146 = scmp.ne.s32.totalorder %s131, %s145
      %p147 = scmp.eq.s32.totalorder %s37, 0
      %p148 = por %p146, %p147
      %s150 = sadd.s32 %s149, 1
      %p153 = scmp.eq.s32.totalorder %s31, 1
      %p154 = scmp.ne.s32.totalorder %s149, %s151
      %p155 = scmp.eq.s32.totalorder %s31, 0
      %p156 = por %p154, %p155
      %p157 = scmp.ne.s32.totalorder %s149, %s151
      %p158 = scmp.eq.s32.totalorder %s36, 1
      %p159 = por %p157, %p158
      %p160 = scmp.ne.s32.totalorder %s151, %s152
      %p161 = scmp.eq.s32.totalorder %s36, 0
      %p162 = por %p160, %p161
      %p163 = scmp.ne.s32.totalorder %s151, %s152
      %p164 = scmp.eq.s32.totalorder %s37, 1
      %p165 = por %p163, %p164
      %p167 = scmp.ne.s32.totalorder %s152, %s166
      %p168 = scmp.eq.s32.totalorder %s37, 0
      %p169 = por %p167, %p168
      %s171 = sadd.s32 %s170, 1
      %p174 = scmp.eq.s32.totalorder %s31, 1
      %p175 = scmp.ne.s32.totalorder %s170, %s172
      %p176 = scmp.eq.s32.totalorder %s31, 0
      %p177 = por %p175, %p176
      %p178 = scmp.ne.s32.totalorder %s170, %s172
      %p179 = scmp.eq.s32.totalorder %s36, 1
      %p180 = por %p178, %p179
      %p181 = scmp.ne.s32.totalorder %s172, %s173
      %p182 = scmp.eq.s32.totalorder %s36, 0
      %p183 = por %p181, %p182
      %p184 = scmp.ne.s32.totalorder %s172, %s173
      %p185 = scmp.eq.s32.totalorder %s37, 1
      %p186 = por %p184, %p185
      %p188 = scmp.ne.s32.totalorder %s173, %s187
      %p189 = scmp.eq.s32.totalorder %s37, 0
      %p190 = por %p188, %p189
      %s192 = sadd.s32 %s191, 1
      %p195 = scmp.eq.s32.totalorder %s31, 1
      %p196 = scmp.ne.s32.totalorder %s191, %s193
      %p197 = scmp.eq.s32.totalorder %s31, 0
      %p198 = por %p196, %p197
      %p199 = scmp.ne.s32.totalorder %s191, %s193
      %p200 = scmp.eq.s32.totalorder %s36, 1
      %p201 = por %p199, %p200
      %p202 = scmp.ne.s32.totalorder %s193, %s194
      %p203 = scmp.eq.s32.totalorder %s36, 0
      %p204 = por %p202, %p203
      %p205 = scmp.ne.s32.totalorder %s193, %s194
      %p206 = scmp.eq.s32.totalorder %s37, 1
      %p207 = por %p205, %p206
      %p209 = scmp.ne.s32.totalorder %s194, %s208
      %p210 = scmp.eq.s32.totalorder %s37, 0
      %p211 = por %p209, %p210
      %s213 = sadd.s32 %s212, 1
      %p216 = scmp.eq.s32.totalorder %s31, 1
      %p217 = scmp.ne.s32.totalorder %s212, %s214
      %p218 = scmp.eq.s32.totalorder %s31, 0
      %p219 = por %p217, %p218
      %p220 = scmp.ne.s32.totalorder %s212, %s214
      %p221 = scmp.eq.s32.totalorder %s36, 1
      %p222 = por %p220, %p221
      %p223 = scmp.ne.s32.totalorder %s214, %s215
      %p224 = scmp.eq.s32.totalorder %s36, 0
      %p225 = por %p223, %p224
      %p226 = scmp.ne.s32.totalorder %s214, %s215
      %p227 = scmp.eq.s32.totalorder %s37, 1
      %p228 = por %p226, %p227
      %p230 = scmp.ne.s32.totalorder %s215, %s229
      %p231 = scmp.eq.s32.totalorder %s37, 0
      %p232 = por %p230, %p231
      %s234 = sadd.s32 %s233, 1
      %p237 = scmp.eq.s32.totalorder %s31, 1
      %p238 = scmp.ne.s32.totalorder %s233, %s235
      %p239 = scmp.eq.s32.totalorder %s31, 0
      %p240 = por %p238, %p239
      %p241 = scmp.ne.s32.totalorder %s233, %s235
      %p242 = scmp.eq.s32.totalorder %s36, 1
      %p243 = por %p241, %p242
      %p244 = scmp.ne.s32.totalorder %s235, %s236
      %p245 = scmp.eq.s32.totalorder %s36, 0
      %p246 = por %p244, %p245
      %p247 = scmp.ne.s32.totalorder %s235, %s236
      %p248 = scmp.eq.s32.totalorder %s37, 1
      %p249 = por %p247, %p248
      %p251 = scmp.ne.s32.totalorder %s236, %s250
      %p252 = scmp.eq.s32.totalorder %s37, 0
      %p253 = por %p251, %p252
      %s255 = sadd.s32 %s254, 1
      %p258 = scmp.eq.s32.totalorder %s31, 1
      %p259 = scmp.ne.s32.totalorder %s254, %s256
      %p260 = scmp.eq.s32.totalorder %s31, 0
      %p261 = por %p259, %p260
      %p262 = scmp.ne.s32.totalorder %s254, %s256
      %p263 = scmp.eq.s32.totalorder %s36, 1
      %p264 = por %p262, %p263
      %p265 = scmp.ne.s32.totalorder %s256, %s257
      %p266 = scmp.eq.s32.totalorder %s36, 0
      %p267 = por %p265, %p266
      %p268 = scmp.ne.s32.totalorder %s256, %s257
      %p269 = scmp.eq.s32.totalorder %s37, 1
      %p270 = por %p268, %p269
      %p272 = scmp.ne.s32.totalorder %s257, %s271
      %p273 = scmp.eq.s32.totalorder %s37, 0
      %p274 = por %p272, %p273
      %s275 = ssub.s32 %s31, %s38
      %p276 = scmp.eq.s32.totalorder %s275, 0
      %s278 = sadd.s32 %s277, 1
      %s279 = scalar_select %p276, %s277, %s278
      %p282 = pneg %p276
      %p283 = scmp.eq.s32.totalorder %s31, 1
      %p284 = por %p282, %p283
      %p285 = scmp.ne.s32.totalorder %s277, %s280
      %p286 = scmp.eq.s32.totalorder %s31, 0
      %p287 = por %p285, %p286
      %p288 = scmp.ne.s32.totalorder %s277, %s280
      %p289 = scmp.eq.s32.totalorder %s36, 1
      %p290 = por %p288, %p289
      %p291 = scmp.ne.s32.totalorder %s280, %s281
      %p292 = scmp.eq.s32.totalorder %s36, 0
      %p293 = por %p291, %p292
      %p294 = scmp.ne.s32.totalorder %s280, %s281
      %p295 = scmp.eq.s32.totalorder %s37, 1
      %p296 = por %p294, %p295
      %p298 = scmp.ne.s32.totalorder %s281, %s297
      %p299 = scmp.eq.s32.totalorder %s37, 0
      %p300 = por %p298, %p299
      %s301 = ssub.s32 %s31, %s38
      %p302 = scmp.eq.s32.totalorder %s301, 0
      %s304 = sadd.s32 %s303, 1
      %s305 = scalar_select %p302, %s303, %s304
      %p308 = pneg %p302
      %p309 = scmp.eq.s32.totalorder %s31, 1
      %p310 = por %p308, %p309
      %p311 = scmp.ne.s32.totalorder %s303, %s306
      %p312 = scmp.eq.s32.totalorder %s31, 0
      %p313 = por %p311, %p312
      %p314 = scmp.ne.s32.totalorder %s303, %s306
      %p315 = scmp.eq.s32.totalorder %s36, 1
      %p316 = por %p314, %p315
      %p317 = scmp.ne.s32.totalorder %s306, %s307
      %p318 = scmp.eq.s32.totalorder %s36, 0
      %p319 = por %p317, %p318
      %p320 = scmp.ne.s32.totalorder %s306, %s307
      %p321 = scmp.eq.s32.totalorder %s37, 1
      %p322 = por %p320, %p321
      %p324 = scmp.ne.s32.totalorder %s307, %s323
      %p325 = scmp.eq.s32.totalorder %s37, 0
      %p326 = por %p324, %p325
      %p327 = scmp.le.s32.totalorder 1, %s31
      %p328 = scmp.lt.s32.totalorder %s31, 3
      %p329 = pnand %p327, %p328
      %p330 = pneg %p329
      // Predicated region
      $region9: #{tpu_custom_call.1} parent=5 // pred_check
        _
      $region10: #{tpu_custom_call.1} parent=5 // pred_check_branch
        %332 = sbr.rel (%p329) target = $region12
      $region11: #{tpu_custom_call.1} parent=5 // pred_region
        %s333 = ssub.s32 %s31, 1
        // Predicated region
        $region13: #{tpu_custom_call.1} parent=11 // pred_check
          %p334 = pneg %p78
        $region14: #{tpu_custom_call.1} parent=11 // pred_check_branch
          %336 = sbr.rel (%p334) target = $region16
        $region15: #{tpu_custom_call.1} parent=11 // pred_region
          %s338 = ssub.s32 8192, 8192
          %339 = vsyncadd [#allocation6], %s338
          %s340 = sshll.u32 [#allocation5], 4
          %s341 = int_to_ptr.vmem [resolvable:$true] %s340
          %346 = dma.hbm_to_vmem [thread:$0]  %s1, 8192, %s341, [#allocation6], 512, 512, 32
        $region16: #{tpu_custom_call.1} parent=11 // pred_fallthru
          _
        // Predicated region
        $region17: #{tpu_custom_call.1} parent=11 // pred_check
          %p347 = pneg %p99
        $region18: #{tpu_custom_call.1} parent=11 // pred_check_branch
          %349 = sbr.rel (%p347) target = $region20
        $region19: #{tpu_custom_call.1} parent=11 // pred_region
          _
        $region20: #{tpu_custom_call.1} parent=11 // pred_fallthru
          _
        // Predicated region
        $region21: #{tpu_custom_call.1} parent=11 // pred_check
          %p350 = pneg %p120
        $region22: #{tpu_custom_call.1} parent=11 // pred_check_branch
          %352 = sbr.rel (%p350) target = $region24
        $region23: #{tpu_custom_call.1} parent=11 // pred_region
          %s354 = ssub.s32 8192, 8192
          %355 = vsyncadd [#allocation6], %s354
          %s356 = sshll.u32 [#allocation7], 4
          %s357 = int_to_ptr.vmem [resolvable:$true] %s356
          %362 = dma.hbm_to_vmem [thread:$0]  %s3, 8192, %s357, [#allocation6], 256, 256, 16
        $region24: #{tpu_custom_call.1} parent=11 // pred_fallthru
          _
        // Predicated region
        $region25: #{tpu_custom_call.1} parent=11 // pred_check
          %p363 = pneg %p141
        $region26: #{tpu_custom_call.1} parent=11 // pred_check_branch
          %365 = sbr.rel (%p363) target = $region28
        $region27: #{tpu_custom_call.1} parent=11 // pred_region
          _
        $region28: #{tpu_custom_call.1} parent=11 // pred_fallthru
          _
        // Predicated region
        $region29: #{tpu_custom_call.1} parent=11 // pred_check
          %p366 = pneg %p162
        $region30: #{tpu_custom_call.1} parent=11 // pred_check_branch
          %368 = sbr.rel (%p366) target = $region32
        $region31: #{tpu_custom_call.1} parent=11 // pred_region
          %s370 = ssub.s32 4096, 4096
          %371 = vsyncadd [#allocation9], %s370
          %s372 = sshll.u32 [#allocation8], 4
          %s373 = int_to_ptr.vmem [resolvable:$true] %s372
          %378 = dma.hbm_to_vmem [thread:$0]  %s5, 4096, %s373, [#allocation9], 128, 128, 8
        $region32: #{tpu_custom_call.1} parent=11 // pred_fallthru
          _
        // Predicated region
        $region33: #{tpu_custom_call.1} parent=11 // pred_check
          %p379 = pneg %p183
        $region34: #{tpu_custom_call.1} parent=11 // pred_check_branch
          %381 = sbr.rel (%p379) target = $region36
        $region35: #{tpu_custom_call.1} parent=11 // pred_region
          _
        $region36: #{tpu_custom_call.1} parent=11 // pred_fallthru
          _
        // Predicated region
        $region37: #{tpu_custom_call.1} parent=11 // pred_check
          %p382 = pneg %p204
        $region38: #{tpu_custom_call.1} parent=11 // pred_check_branch
          %384 = sbr.rel (%p382) target = $region40
        $region39: #{tpu_custom_call.1} parent=11 // pred_region
          %s386 = ssub.s32 8192, 8192
          %387 = vsyncadd [#allocation9], %s386
          %s388 = sshll.u32 [#allocation10], 4
          %s389 = int_to_ptr.vmem [resolvable:$true] %s388
          %394 = dma.hbm_to_vmem [thread:$0]  %s7, 8192, %s389, [#allocation9], 256, 256, 16
        $region40: #{tpu_custom_call.1} parent=11 // pred_fallthru
          _
        // Predicated region
        $region41: #{tpu_custom_call.1} parent=11 // pred_check
          %p395 = pneg %p225
        $region42: #{tpu_custom_call.1} parent=11 // pred_check_branch
          %397 = sbr.rel (%p395) target = $region44
        $region43: #{tpu_custom_call.1} parent=11 // pred_region
          _
        $region44: #{tpu_custom_call.1} parent=11 // pred_fallthru
          _
        // Predicated region
        $region45: #{tpu_custom_call.1} parent=11 // pred_check
          %p398 = pneg %p246
        $region46: #{tpu_custom_call.1} parent=11 // pred_check_branch
          %400 = sbr.rel (%p398) target = $region48
        $region47: #{tpu_custom_call.1} parent=11 // pred_region
          %s402 = ssub.s32 8192, 8192
          %403 = vsyncadd [#allocation12], %s402
          %s404 = sshll.u32 [#allocation11], 4
          %s405 = int_to_ptr.vmem [resolvable:$true] %s404
          %410 = dma.hbm_to_vmem [thread:$0]  %s9, 8192, %s405, [#allocation12], 256, 256, 16
        $region48: #{tpu_custom_call.1} parent=11 // pred_fallthru
          _
        // Predicated region
        $region49: #{tpu_custom_call.1} parent=11 // pred_check
          %p411 = pneg %p267
        $region50: #{tpu_custom_call.1} parent=11 // pred_check_branch
          %413 = sbr.rel (%p411) target = $region52
        $region51: #{tpu_custom_call.1} parent=11 // pred_region
          _
        $region52: #{tpu_custom_call.1} parent=11 // pred_fallthru
          _
      $region12: #{tpu_custom_call.1} parent=5 // pred_fallthru
        _
      %p414 = scmp.lt.s32.totalorder %s31, 2
      // Predicated region
      $region53: #{tpu_custom_call.1} parent=5 // pred_check
        %p415 = pneg %p414
      $region54: #{tpu_custom_call.1} parent=5 // pred_check_branch
        %417 = sbr.rel (%p415) target = $region56
      $region55: #{tpu_custom_call.1} parent=5 // pred_region
        // Predicated region
        $region57: #{tpu_custom_call.1} parent=55 // pred_check
          %p418 = pneg %p51
        $region58: #{tpu_custom_call.1} parent=55 // pred_check_branch
          %420 = sbr.rel (%p418) target = $region60
        $region59: #{tpu_custom_call.1} parent=55 // pred_region
          %s421 = sand.u32 %s41, 1
          %s422 = scalar_lea.sflag [#allocation3], %s421
          %s423 = sand.u32 %s41, 1
          %s424 = smul.addr %s423, 8
          %s425 = scalar_lea.vmem [#allocation2], %s424
          %s427 = ssub.s32 128, 128
          %428 = vsyncadd %s422, %s427
          %s429 = smul.addr %s31, 128
          %s430 = scalar_lea.hbm %s0, %s429
          %s432 = sshll.u32 %s425, 4
          %s433 = int_to_ptr.vmem [resolvable:$true] %s432
          %435 = dma.hbm_to_vmem [thread:$0]  %s430, 128, %s433, %s422
        $region60: #{tpu_custom_call.1} parent=55 // pred_fallthru
          _
      $region56: #{tpu_custom_call.1} parent=5 // pred_fallthru
        _
      %p436 = scmp.le.s32.totalorder 1, %s31
      %p437 = scmp.lt.s32.totalorder %s31, 3
      %p438 = pnand %p436, %p437
      %p439 = pneg %p438
      // Predicated region
      $region61: #{tpu_custom_call.1} parent=5 // pred_check
        _
      $region62: #{tpu_custom_call.1} parent=5 // pred_check_branch
        %441 = sbr.rel (%p438) target = $region64
      $region63: #{tpu_custom_call.1} parent=5 // pred_region
        %s442 = ssub.s32 %s31, 1
        %s443 = sand.u32 %s44, 1
        %s444 = scalar_lea.sflag [#allocation3], %s443
        %s445 = sand.u32 %s44, 1
        %s446 = smul.addr %s445, 8
        %s447 = scalar_lea.vmem [#allocation2], %s446
        // Predicated region
        $region65: #{tpu_custom_call.1} parent=63 // pred_check
          %p448 = pneg %p57
        $region66: #{tpu_custom_call.1} parent=63 // pred_check_branch
          %450 = sbr.rel (%p448) target = $region68
        $region67: #{tpu_custom_call.1} parent=63 // pred_region
          %451 = dma.done %s444, 128
        $region68: #{tpu_custom_call.1} parent=63 // pred_fallthru
          _
        // Predicated region
        $region69: #{tpu_custom_call.1} parent=63 // pred_check
          %p452 = pneg %p78
        $region70: #{tpu_custom_call.1} parent=63 // pred_check_branch
          %454 = sbr.rel (%p452) target = $region72
        $region71: #{tpu_custom_call.1} parent=63 // pred_region
          %455 = dma.done [#allocation6], 8192
        $region72: #{tpu_custom_call.1} parent=63 // pred_fallthru
          _
        // Predicated region
        $region73: #{tpu_custom_call.1} parent=63 // pred_check
          %p456 = pneg %p120
        $region74: #{tpu_custom_call.1} parent=63 // pred_check_branch
          %458 = sbr.rel (%p456) target = $region76
        $region75: #{tpu_custom_call.1} parent=63 // pred_region
          %459 = dma.done [#allocation6], 8192
        $region76: #{tpu_custom_call.1} parent=63 // pred_fallthru
          _
        // Predicated region
        $region77: #{tpu_custom_call.1} parent=63 // pred_check
          %p460 = pneg %p162
        $region78: #{tpu_custom_call.1} parent=63 // pred_check_branch
          %462 = sbr.rel (%p460) target = $region80
        $region79: #{tpu_custom_call.1} parent=63 // pred_region
          %463 = dma.done [#allocation9], 4096
        $region80: #{tpu_custom_call.1} parent=63 // pred_fallthru
          _
        // Predicated region
        $region81: #{tpu_custom_call.1} parent=63 // pred_check
          %p464 = pneg %p204
        $region82: #{tpu_custom_call.1} parent=63 // pred_check_branch
          %466 = sbr.rel (%p464) target = $region84
        $region83: #{tpu_custom_call.1} parent=63 // pred_region
          %467 = dma.done [#allocation9], 8192
        $region84: #{tpu_custom_call.1} parent=63 // pred_fallthru
          _
        // Predicated region
        $region85: #{tpu_custom_call.1} parent=63 // pred_check
          %p468 = pneg %p246
        $region86: #{tpu_custom_call.1} parent=63 // pred_check_branch
          %470 = sbr.rel (%p468) target = $region88
        $region87: #{tpu_custom_call.1} parent=63 // pred_region
          %471 = dma.done [#allocation12], 8192
        $region88: #{tpu_custom_call.1} parent=63 // pred_fallthru
          _
        %s472 = sand.u32 %s44, 1
        %s473 = scalar_lea.sflag [#allocation3], %s472
        %s474 = sand.u32 %s44, 1
        %s475 = smul.addr %s474, 8
        %s476 = scalar_lea.vmem [#allocation2], %s475
        %p477 = pneg %p57
        %p478 = pneg %p54
        %p479 = pneg %p78
        %p480 = pneg %p75
        %p481 = pneg %p99
        %p482 = pneg %p96
        %p483 = pneg %p120
        %p484 = pneg %p117
        %p485 = pneg %p141
        %p486 = pneg %p138
        %p487 = pneg %p162
        %p488 = pneg %p159
        %p489 = pneg %p183
        %p490 = pneg %p180
        %p491 = pneg %p204
        %p492 = pneg %p201
        %p493 = pneg %p225
        %p494 = pneg %p222
        %p495 = pneg %p246
        %p496 = pneg %p243
        %p497 = pneg %p267
        %p498 = pneg %p264
        %p499 = pneg %p293
        %p500 = pneg %p290
        %s501 = sand.u32 %s280, 1
        %s502 = scalar_lea.sflag [#allocation4], %s501
        %s503 = sand.u32 %s280, 1
        %s504 = smul.addr %s503, 8
        %s505 = scalar_lea.vmem [#allocation13], %s504
        %p506 = pneg %p319
        %p507 = pneg %p316
        %s508 = sand.u32 %s306, 1
        %s509 = scalar_lea.sflag [#allocation15], %s508
        %s510 = sand.u32 %s306, 1
        %s511 = smul.addr %s510, 16
        %s512 = scalar_lea.vmem [#allocation14], %s511
        %v513 = vld [vmem:[%s447] sm:$0xff]
        %v514 = vld [vmem:[#allocation5] sm:$0xff]
        %v515 = vld [vmem:[#allocation5 + $0x8] sm:$0xff]
        %v516 = vld [vmem:[#allocation5 + $0x10] sm:$0xff]
        %v517 = vld [vmem:[#allocation5 + $0x18] sm:$0xff]
        %v518 = vld [vmem:[#allocation5 + $0x20] sm:$0xff]
        %v519 = vld [vmem:[#allocation5 + $0x28] sm:$0xff]
        %v520 = vld [vmem:[#allocation5 + $0x30] sm:$0xff]
        %v521 = vld [vmem:[#allocation5 + $0x38] sm:$0xff]
        %v522 = vld [vmem:[#allocation5 + $0x40] sm:$0xff]
        %v523 = vld [vmem:[#allocation5 + $0x48] sm:$0xff]
        %v524 = vld [vmem:[#allocation5 + $0x50] sm:$0xff]
        %v525 = vld [vmem:[#allocation5 + $0x58] sm:$0xff]
        %v526 = vld [vmem:[#allocation5 + $0x60] sm:$0xff]
        %v527 = vld [vmem:[#allocation5 + $0x68] sm:$0xff]
        %v528 = vld [vmem:[#allocation5 + $0x70] sm:$0xff]
        %v529 = vld [vmem:[#allocation5 + $0x78] sm:$0xff]
        %v530 = vld [vmem:[#allocation5 + $0x80] sm:$0xff]
        %v531 = vld [vmem:[#allocation5 + $0x88] sm:$0xff]
        %v532 = vld [vmem:[#allocation5 + $0x90] sm:$0xff]
        %v533 = vld [vmem:[#allocation5 + $0x98] sm:$0xff]
        %v534 = vld [vmem:[#allocation5 + $0xa0] sm:$0xff]
        %v535 = vld [vmem:[#allocation5 + $0xa8] sm:$0xff]
        %v536 = vld [vmem:[#allocation5 + $0xb0] sm:$0xff]
        %v537 = vld [vmem:[#allocation5 + $0xb8] sm:$0xff]
        %v538 = vld [vmem:[#allocation5 + $0xc0] sm:$0xff]
        %v539 = vld [vmem:[#allocation5 + $0xc8] sm:$0xff]
        %v540 = vld [vmem:[#allocation5 + $0xd0] sm:$0xff]
        %v541 = vld [vmem:[#allocation5 + $0xd8] sm:$0xff]
        %v542 = vld [vmem:[#allocation5 + $0xe0] sm:$0xff]
        %v543 = vld [vmem:[#allocation5 + $0xe8] sm:$0xff]
        %v544 = vld [vmem:[#allocation5 + $0xf0] sm:$0xff]
        %v545 = vld [vmem:[#allocation5 + $0xf8] sm:$0xff]
        %v546 = vld [vmem:[#allocation5 + $0x100] sm:$0xff]
        %v547 = vld [vmem:[#allocation5 + $0x108] sm:$0xff]
        %v548 = vld [vmem:[#allocation5 + $0x110] sm:$0xff]
        %v549 = vld [vmem:[#allocation5 + $0x118] sm:$0xff]
        %v550 = vld [vmem:[#allocation5 + $0x120] sm:$0xff]
        %v551 = vld [vmem:[#allocation5 + $0x128] sm:$0xff]
        %v552 = vld [vmem:[#allocation5 + $0x130] sm:$0xff]
        %v553 = vld [vmem:[#allocation5 + $0x138] sm:$0xff]
        %v554 = vld [vmem:[#allocation5 + $0x140] sm:$0xff]
        %v555 = vld [vmem:[#allocation5 + $0x148] sm:$0xff]
        %v556 = vld [vmem:[#allocation5 + $0x150] sm:$0xff]
        %v557 = vld [vmem:[#allocation5 + $0x158] sm:$0xff]
        %v558 = vld [vmem:[#allocation5 + $0x160] sm:$0xff]
        %v559 = vld [vmem:[#allocation5 + $0x168] sm:$0xff]
        %v560 = vld [vmem:[#allocation5 + $0x170] sm:$0xff]
        %v561 = vld [vmem:[#allocation5 + $0x178] sm:$0xff]
        %v562 = vld [vmem:[#allocation5 + $0x180] sm:$0xff]
        %v563 = vld [vmem:[#allocation5 + $0x188] sm:$0xff]
        %v564 = vld [vmem:[#allocation5 + $0x190] sm:$0xff]
        %v565 = vld [vmem:[#allocation5 + $0x198] sm:$0xff]
        %v566 = vld [vmem:[#allocation5 + $0x1a0] sm:$0xff]
        %v567 = vld [vmem:[#allocation5 + $0x1a8] sm:$0xff]
        %v568 = vld [vmem:[#allocation5 + $0x1b0] sm:$0xff]
        %v569 = vld [vmem:[#allocation5 + $0x1b8] sm:$0xff]
        %v570 = vld [vmem:[#allocation5 + $0x1c0] sm:$0xff]
        %v571 = vld [vmem:[#allocation5 + $0x1c8] sm:$0xff]
        %v572 = vld [vmem:[#allocation5 + $0x1d0] sm:$0xff]
        %v573 = vld [vmem:[#allocation5 + $0x1d8] sm:$0xff]
        %v574 = vld [vmem:[#allocation5 + $0x1e0] sm:$0xff]
        %v575 = vld [vmem:[#allocation5 + $0x1e8] sm:$0xff]
        %v576 = vld [vmem:[#allocation5 + $0x1f0] sm:$0xff]
        %v577 = vld [vmem:[#allocation5 + $0x1f8] sm:$0xff]
        %v578 = vld [vmem:[%s2] sm:$0xf]
        %v580 = vlaneseq
        %v581 = vshrl.u32 %v580, 7
        %v582 = vsub.s32 0, %v581
        %v583 = vrot.slane %v578, %v582
        %v584 = vlaneseq
        %v585 = vshrl.u32 %v584, 7
        %v586 = vsub.s32 1, %v585
        %v587 = vrot.slane %v578, %v586
        %v588 = vlaneseq
        %v589 = vshrl.u32 %v588, 7
        %v590 = vsub.s32 2, %v589
        %v591 = vrot.slane %v578, %v590
        %v592 = vlaneseq
        %v593 = vshrl.u32 %v592, 7
        %v594 = vsub.s32 3, %v593
        %v595 = vrot.slane %v578, %v594
        %600 = vmatprep.subr.mxu0 %v515
        %601 = vmatpush1.msra.mxu0 %v514
        %602 = vmatprep.subr.mxu0 %v519
        %603 = vmatpush1.msra.mxu0 %v518
        %604 = vmatprep.subr.mxu0 %v523
        %605 = vmatpush1.msra.mxu0 %v522
        %606 = vmatprep.subr.mxu0 %v527
        %607 = vmatpush1.msra.mxu0 %v526
        %608 = vmatprep.subr.mxu0 %v531
        %609 = vmatpush1.msra.mxu0 %v530
        %610 = vmatprep.subr.mxu0 %v535
        %611 = vmatpush1.msra.mxu0 %v534
        %612 = vmatprep.subr.mxu0 %v539
        %613 = vmatpush1.msra.mxu0 %v538
        %614 = vmatprep.subr.mxu0 %v543
        %615 = vmatpush1.msra.mxu0 %v542
        %616 = vmatprep.subr.mxu0 %v547
        %617 = vmatpush1.msra.mxu0 %v546
        %618 = vmatprep.subr.mxu0 %v551
        %619 = vmatpush1.msra.mxu0 %v550
        %620 = vmatprep.subr.mxu0 %v555
        %621 = vmatpush1.msra.mxu0 %v554
        %622 = vmatprep.subr.mxu0 %v559
        %623 = vmatpush1.msra.mxu0 %v558
        %624 = vmatprep.subr.mxu0 %v563
        %625 = vmatpush1.msra.mxu0 %v562
        %626 = vmatprep.subr.mxu0 %v567
        %627 = vmatpush1.msra.mxu0 %v566
        %628 = vmatprep.subr.mxu0 %v571
        %629 = vmatpush1.msra.mxu0 %v570
        %630 = vmatprep.subr.mxu0 %v575
        %631 = vmatpush1.msra.mxu0 %v574
        %632 = vmatprep.subr.mxu0 0.0
        %633 = vmatpush1.msra.mxu0 0.0
        %634 = vmatprep.subr.mxu0 0.0
        %635 = vmatpush1.msra.mxu0 0.0
        %636 = vmatprep.subr.mxu0 0.0
        %637 = vmatpush1.msra.mxu0 0.0
        %638 = vmatprep.subr.mxu0 0.0
        %639 = vmatpush1.msra.mxu0 0.0
        %640 = vmatprep.subr.mxu0 0.0
        %641 = vmatpush1.msra.mxu0 0.0
        %642 = vmatprep.subr.mxu0 0.0
        %643 = vmatpush1.msra.mxu0 0.0
        %644 = vmatprep.subr.mxu0 0.0
        %645 = vmatpush1.msra.mxu0 0.0
        %646 = vmatprep.subr.mxu0 0.0
        %647 = vmatpush1.msra.mxu0 0.0
        %648 = vmatprep.subr.mxu0 0.0
        %649 = vmatpush1.msra.mxu0 0.0
        %650 = vmatprep.subr.mxu0 0.0
        %651 = vmatpush1.msra.mxu0 0.0
        %652 = vmatprep.subr.mxu0 0.0
        %653 = vmatpush1.msra.mxu0 0.0
        %654 = vmatprep.subr.mxu0 0.0
        %655 = vmatpush1.msra.mxu0 0.0
        %656 = vmatprep.subr.mxu0 0.0
        %657 = vmatpush1.msra.mxu0 0.0
        %658 = vmatprep.subr.mxu0 0.0
        %659 = vmatpush1.msra.mxu0 0.0
        %660 = vmatprep.subr.mxu0 0.0
        %661 = vmatpush1.msra.mxu0 0.0
        %662 = vmatprep.subr.mxu0 0.0
        %663 = vmatpush1.msra.mxu0 0.0
        %664 = vmatprep.mubr.f32.mxu0 0.0
        %665 = vmatmul.mubr.f32.gmra.mrb[0].mxu0 %v513
        %v666 = vpop.f32.mrb[0].mxu0
        %v667 = vadd.f32 %v583, %v666
        %v668 = vpop.f32.mrb[0].mxu0
        %v669 = vadd.f32 %v587, %v668
        %670 = vdwg.mxu0
        %671 = vmatprep.subr.mxu0 %v517
        %672 = vmatpush1.msra.mxu0 %v516
        %673 = vmatprep.subr.mxu0 %v521
        %674 = vmatpush1.msra.mxu0 %v520
        %675 = vmatprep.subr.mxu0 %v525
        %676 = vmatpush1.msra.mxu0 %v524
        %677 = vmatprep.subr.mxu0 %v529
        %678 = vmatpush1.msra.mxu0 %v528
        %679 = vmatprep.subr.mxu0 %v533
        %680 = vmatpush1.msra.mxu0 %v532
        %681 = vmatprep.subr.mxu0 %v537
        %682 = vmatpush1.msra.mxu0 %v536
        %683 = vmatprep.subr.mxu0 %v541
        %684 = vmatpush1.msra.mxu0 %v540
        %685 = vmatprep.subr.mxu0 %v545
        %686 = vmatpush1.msra.mxu0 %v544
        %687 = vmatprep.subr.mxu0 %v549
        %688 = vmatpush1.msra.mxu0 %v548
        %689 = vmatprep.subr.mxu0 %v553
        %690 = vmatpush1.msra.mxu0 %v552
        %691 = vmatprep.subr.mxu0 %v557
        %692 = vmatpush1.msra.mxu0 %v556
        %693 = vmatprep.subr.mxu0 %v561
        %694 = vmatpush1.msra.mxu0 %v560
        %695 = vmatprep.subr.mxu0 %v565
        %696 = vmatpush1.msra.mxu0 %v564
        %697 = vmatprep.subr.mxu0 %v569
        %698 = vmatpush1.msra.mxu0 %v568
        %699 = vmatprep.subr.mxu0 %v573
        %700 = vmatpush1.msra.mxu0 %v572
        %701 = vmatprep.subr.mxu0 %v577
        %702 = vmatpush1.msra.mxu0 %v576
        %703 = vmatprep.subr.mxu0 0.0
        %704 = vmatpush1.msra.mxu0 0.0
        %705 = vmatprep.subr.mxu0 0.0
        %706 = vmatpush1.msra.mxu0 0.0
        %707 = vmatprep.subr.mxu0 0.0
        %708 = vmatpush1.msra.mxu0 0.0
        %709 = vmatprep.subr.mxu0 0.0
        %710 = vmatpush1.msra.mxu0 0.0
        %711 = vmatprep.subr.mxu0 0.0
        %712 = vmatpush1.msra.mxu0 0.0
        %713 = vmatprep.subr.mxu0 0.0
        %714 = vmatpush1.msra.mxu0 0.0
        %715 = vmatprep.subr.mxu0 0.0
        %716 = vmatpush1.msra.mxu0 0.0
        %717 = vmatprep.subr.mxu0 0.0
        %718 = vmatpush1.msra.mxu0 0.0
        %719 = vmatprep.subr.mxu0 0.0
        %720 = vmatpush1.msra.mxu0 0.0
        %721 = vmatprep.subr.mxu0 0.0
        %722 = vmatpush1.msra.mxu0 0.0
        %723 = vmatprep.subr.mxu0 0.0
        %724 = vmatpush1.msra.mxu0 0.0
        %725 = vmatprep.subr.mxu0 0.0
        %726 = vmatpush1.msra.mxu0 0.0
        %727 = vmatprep.subr.mxu0 0.0
        %728 = vmatpush1.msra.mxu0 0.0
        %729 = vmatprep.subr.mxu0 0.0
        %730 = vmatpush1.msra.mxu0 0.0
        %731 = vmatprep.subr.mxu0 0.0
        %732 = vmatpush1.msra.mxu0 0.0
        %733 = vmatprep.subr.mxu0 0.0
        %734 = vmatpush1.msra.mxu0 0.0
        %735 = vmatprep.mubr.f32.mxu0 0.0
        %736 = vmatmul.mubr.f32.gmra.mrb[0].mxu0 %v513
        %v737 = vpop.f32.mrb[0].mxu0
        %v738 = vadd.f32 %v591, %v737
        %v739 = vpop.f32.mrb[0].mxu0
        %v740 = vadd.f32 %v595, %v739
        %741 = vdwg.mxu0
        %v742 = vmax.f32 %v667, 0.0
        %v743 = vmax.f32 %v669, 0.0
        %v744 = vmax.f32 %v738, 0.0
        %v745 = vmax.f32 %v740, 0.0
        %v746 = vld [vmem:[#allocation7] sm:$0xff]
        %v747 = vld [vmem:[#allocation7 + $0x8] sm:$0xff]
        %v748 = vld [vmem:[#allocation7 + $0x10] sm:$0xff]
        %v749 = vld [vmem:[#allocation7 + $0x18] sm:$0xff]
        %v750 = vld [vmem:[#allocation7 + $0x20] sm:$0xff]
        %v751 = vld [vmem:[#allocation7 + $0x28] sm:$0xff]
        %v752 = vld [vmem:[#allocation7 + $0x30] sm:$0xff]
        %v753 = vld [vmem:[#allocation7 + $0x38] sm:$0xff]
        %v754 = vld [vmem:[#allocation7 + $0x40] sm:$0xff]
        %v755 = vld [vmem:[#allocation7 + $0x48] sm:$0xff]
        %v756 = vld [vmem:[#allocation7 + $0x50] sm:$0xff]
        %v757 = vld [vmem:[#allocation7 + $0x58] sm:$0xff]
        %v758 = vld [vmem:[#allocation7 + $0x60] sm:$0xff]
        %v759 = vld [vmem:[#allocation7 + $0x68] sm:$0xff]
        %v760 = vld [vmem:[#allocation7 + $0x70] sm:$0xff]
        %v761 = vld [vmem:[#allocation7 + $0x78] sm:$0xff]
        %v762 = vld [vmem:[#allocation7 + $0x80] sm:$0xff]
        %v763 = vld [vmem:[#allocation7 + $0x88] sm:$0xff]
        %v764 = vld [vmem:[#allocation7 + $0x90] sm:$0xff]
        %v765 = vld [vmem:[#allocation7 + $0x98] sm:$0xff]
        %v766 = vld [vmem:[#allocation7 + $0xa0] sm:$0xff]
        %v767 = vld [vmem:[#allocation7 + $0xa8] sm:$0xff]
        %v768 = vld [vmem:[#allocation7 + $0xb0] sm:$0xff]
        %v769 = vld [vmem:[#allocation7 + $0xb8] sm:$0xff]
        %v770 = vld [vmem:[#allocation7 + $0xc0] sm:$0xff]
        %v771 = vld [vmem:[#allocation7 + $0xc8] sm:$0xff]
        %v772 = vld [vmem:[#allocation7 + $0xd0] sm:$0xff]
        %v773 = vld [vmem:[#allocation7 + $0xd8] sm:$0xff]
        %v774 = vld [vmem:[#allocation7 + $0xe0] sm:$0xff]
        %v775 = vld [vmem:[#allocation7 + $0xe8] sm:$0xff]
        %v776 = vld [vmem:[#allocation7 + $0xf0] sm:$0xff]
        %v777 = vld [vmem:[#allocation7 + $0xf8] sm:$0xff]
        %v778 = vld [vmem:[#allocation7 + $0x100] sm:$0xff]
        %v779 = vld [vmem:[#allocation7 + $0x108] sm:$0xff]
        %v780 = vld [vmem:[#allocation7 + $0x110] sm:$0xff]
        %v781 = vld [vmem:[#allocation7 + $0x118] sm:$0xff]
        %v782 = vld [vmem:[#allocation7 + $0x120] sm:$0xff]
        %v783 = vld [vmem:[#allocation7 + $0x128] sm:$0xff]
        %v784 = vld [vmem:[#allocation7 + $0x130] sm:$0xff]
        %v785 = vld [vmem:[#allocation7 + $0x138] sm:$0xff]
        %v786 = vld [vmem:[#allocation7 + $0x140] sm:$0xff]
        %v787 = vld [vmem:[#allocation7 + $0x148] sm:$0xff]
        %v788 = vld [vmem:[#allocation7 + $0x150] sm:$0xff]
        %v789 = vld [vmem:[#allocation7 + $0x158] sm:$0xff]
        %v790 = vld [vmem:[#allocation7 + $0x160] sm:$0xff]
        %v791 = vld [vmem:[#allocation7 + $0x168] sm:$0xff]
        %v792 = vld [vmem:[#allocation7 + $0x170] sm:$0xff]
        %v793 = vld [vmem:[#allocation7 + $0x178] sm:$0xff]
        %v794 = vld [vmem:[#allocation7 + $0x180] sm:$0xff]
        %v795 = vld [vmem:[#allocation7 + $0x188] sm:$0xff]
        %v796 = vld [vmem:[#allocation7 + $0x190] sm:$0xff]
        %v797 = vld [vmem:[#allocation7 + $0x198] sm:$0xff]
        %v798 = vld [vmem:[#allocation7 + $0x1a0] sm:$0xff]
        %v799 = vld [vmem:[#allocation7 + $0x1a8] sm:$0xff]
        %v800 = vld [vmem:[#allocation7 + $0x1b0] sm:$0xff]
        %v801 = vld [vmem:[#allocation7 + $0x1b8] sm:$0xff]
        %v802 = vld [vmem:[#allocation7 + $0x1c0] sm:$0xff]
        %v803 = vld [vmem:[#allocation7 + $0x1c8] sm:$0xff]
        %v804 = vld [vmem:[#allocation7 + $0x1d0] sm:$0xff]
        %v805 = vld [vmem:[#allocation7 + $0x1d8] sm:$0xff]
        %v806 = vld [vmem:[#allocation7 + $0x1e0] sm:$0xff]
        %v807 = vld [vmem:[#allocation7 + $0x1e8] sm:$0xff]
        %v808 = vld [vmem:[#allocation7 + $0x1f0] sm:$0xff]
        %v809 = vld [vmem:[#allocation7 + $0x1f8] sm:$0xff]
        %v810 = vld [vmem:[%s4] sm:$0x3]
        %v812 = vlaneseq
        %v813 = vshrl.u32 %v812, 7
        %v814 = vsub.s32 0, %v813
        %v815 = vrot.slane %v810, %v814
        %v816 = vlaneseq
        %v817 = vshrl.u32 %v816, 7
        %v818 = vsub.s32 1, %v817
        %v819 = vrot.slane %v810, %v818
        %822 = vmatprep.subr.mxu0 %v747
        %823 = vmatpush1.msra.mxu0 %v746
        %824 = vmatprep.subr.mxu0 %v749
        %825 = vmatpush1.msra.mxu0 %v748
        %826 = vmatprep.subr.mxu0 %v751
        %827 = vmatpush1.msra.mxu0 %v750
        %828 = vmatprep.subr.mxu0 %v753
        %829 = vmatpush1.msra.mxu0 %v752
        %830 = vmatprep.subr.mxu0 %v755
        %831 = vmatpush1.msra.mxu0 %v754
        %832 = vmatprep.subr.mxu0 %v757
        %833 = vmatpush1.msra.mxu0 %v756
        %834 = vmatprep.subr.mxu0 %v759
        %835 = vmatpush1.msra.mxu0 %v758
        %836 = vmatprep.subr.mxu0 %v761
        %837 = vmatpush1.msra.mxu0 %v760
        %838 = vmatprep.subr.mxu0 %v763
        %839 = vmatpush1.msra.mxu0 %v762
        %840 = vmatprep.subr.mxu0 %v765
        %841 = vmatpush1.msra.mxu0 %v764
        %842 = vmatprep.subr.mxu0 %v767
        %843 = vmatpush1.msra.mxu0 %v766
        %844 = vmatprep.subr.mxu0 %v769
        %845 = vmatpush1.msra.mxu0 %v768
        %846 = vmatprep.subr.mxu0 %v771
        %847 = vmatpush1.msra.mxu0 %v770
        %848 = vmatprep.subr.mxu0 %v773
        %849 = vmatpush1.msra.mxu0 %v772
        %850 = vmatprep.subr.mxu0 %v775
        %851 = vmatpush1.msra.mxu0 %v774
        %852 = vmatprep.subr.mxu0 %v777
        %853 = vmatpush1.msra.mxu0 %v776
        %854 = vmatprep.subr.mxu0 %v779
        %855 = vmatpush1.msra.mxu0 %v778
        %856 = vmatprep.subr.mxu0 %v781
        %857 = vmatpush1.msra.mxu0 %v780
        %858 = vmatprep.subr.mxu0 %v783
        %859 = vmatpush1.msra.mxu0 %v782
        %860 = vmatprep.subr.mxu0 %v785
        %861 = vmatpush1.msra.mxu0 %v784
        %862 = vmatprep.subr.mxu0 %v787
        %863 = vmatpush1.msra.mxu0 %v786
        %864 = vmatprep.subr.mxu0 %v789
        %865 = vmatpush1.msra.mxu0 %v788
        %866 = vmatprep.subr.mxu0 %v791
        %867 = vmatpush1.msra.mxu0 %v790
        %868 = vmatprep.subr.mxu0 %v793
        %869 = vmatpush1.msra.mxu0 %v792
        %870 = vmatprep.subr.mxu0 %v795
        %871 = vmatpush1.msra.mxu0 %v794
        %872 = vmatprep.subr.mxu0 %v797
        %873 = vmatpush1.msra.mxu0 %v796
        %874 = vmatprep.subr.mxu0 %v799
        %875 = vmatpush1.msra.mxu0 %v798
        %876 = vmatprep.subr.mxu0 %v801
        %877 = vmatpush1.msra.mxu0 %v800
        %878 = vmatprep.subr.mxu0 %v803
        %879 = vmatpush1.msra.mxu0 %v802
        %880 = vmatprep.subr.mxu0 %v805
        %881 = vmatpush1.msra.mxu0 %v804
        %882 = vmatprep.subr.mxu0 %v807
        %883 = vmatpush1.msra.mxu0 %v806
        %884 = vmatprep.subr.mxu0 %v809
        %885 = vmatpush1.msra.mxu0 %v808
        %886 = vmatprep.mubr.f32.mxu0 %v743
        %887 = vmatmul.mubr.f32.gmra.mrb[0].mxu0 %v742
        %v888 = vpop.f32.mrb[0].mxu0
        %v889 = vadd.f32 %v815, %v888
        %v890 = vpop.f32.mrb[0].mxu0
        %v891 = vadd.f32 %v819, %v890
        %892 = vdwg.mxu0
        %v893 = vmax.f32 %v889, 0.0
        %v894 = vmax.f32 %v891, 0.0
        %v895 = vld [vmem:[#allocation8] sm:$0xff]
        %v896 = vld [vmem:[#allocation8 + $0x8] sm:$0xff]
        %v897 = vld [vmem:[#allocation8 + $0x10] sm:$0xff]
        %v898 = vld [vmem:[#allocation8 + $0x18] sm:$0xff]
        %v899 = vld [vmem:[#allocation8 + $0x20] sm:$0xff]
        %v900 = vld [vmem:[#allocation8 + $0x28] sm:$0xff]
        %v901 = vld [vmem:[#allocation8 + $0x30] sm:$0xff]
        %v902 = vld [vmem:[#allocation8 + $0x38] sm:$0xff]
        %v903 = vld [vmem:[#allocation8 + $0x40] sm:$0xff]
        %v904 = vld [vmem:[#allocation8 + $0x48] sm:$0xff]
        %v905 = vld [vmem:[#allocation8 + $0x50] sm:$0xff]
        %v906 = vld [vmem:[#allocation8 + $0x58] sm:$0xff]
        %v907 = vld [vmem:[#allocation8 + $0x60] sm:$0xff]
        %v908 = vld [vmem:[#allocation8 + $0x68] sm:$0xff]
        %v909 = vld [vmem:[#allocation8 + $0x70] sm:$0xff]
        %v910 = vld [vmem:[#allocation8 + $0x78] sm:$0xff]
        %v911 = vld [vmem:[#allocation8 + $0x80] sm:$0xff]
        %v912 = vld [vmem:[#allocation8 + $0x88] sm:$0xff]
        %v913 = vld [vmem:[#allocation8 + $0x90] sm:$0xff]
        %v914 = vld [vmem:[#allocation8 + $0x98] sm:$0xff]
        %v915 = vld [vmem:[#allocation8 + $0xa0] sm:$0xff]
        %v916 = vld [vmem:[#allocation8 + $0xa8] sm:$0xff]
        %v917 = vld [vmem:[#allocation8 + $0xb0] sm:$0xff]
        %v918 = vld [vmem:[#allocation8 + $0xb8] sm:$0xff]
        %v919 = vld [vmem:[#allocation8 + $0xc0] sm:$0xff]
        %v920 = vld [vmem:[#allocation8 + $0xc8] sm:$0xff]
        %v921 = vld [vmem:[#allocation8 + $0xd0] sm:$0xff]
        %v922 = vld [vmem:[#allocation8 + $0xd8] sm:$0xff]
        %v923 = vld [vmem:[#allocation8 + $0xe0] sm:$0xff]
        %v924 = vld [vmem:[#allocation8 + $0xe8] sm:$0xff]
        %v925 = vld [vmem:[#allocation8 + $0xf0] sm:$0xff]
        %v926 = vld [vmem:[#allocation8 + $0xf8] sm:$0xff]
        %v927 = vld [vmem:[%s6] sm:$0x1]
        %v929 = vlaneseq
        %v930 = vshrl.u32 %v929, 7
        %v931 = vsub.s32 0, %v930
        %v932 = vrot.slane %v927, %v931
        %934 = vmatprep.subr.mxu0 0.0
        %935 = vmatpush1.msra.mxu0 %v895
        %936 = vmatprep.subr.mxu0 0.0
        %937 = vmatpush1.msra.mxu0 %v896
        %938 = vmatprep.subr.mxu0 0.0
        %939 = vmatpush1.msra.mxu0 %v897
        %940 = vmatprep.subr.mxu0 0.0
        %941 = vmatpush1.msra.mxu0 %v898
        %942 = vmatprep.subr.mxu0 0.0
        %943 = vmatpush1.msra.mxu0 %v899
        %944 = vmatprep.subr.mxu0 0.0
        %945 = vmatpush1.msra.mxu0 %v900
        %946 = vmatprep.subr.mxu0 0.0
        %947 = vmatpush1.msra.mxu0 %v901
        %948 = vmatprep.subr.mxu0 0.0
        %949 = vmatpush1.msra.mxu0 %v902
        %950 = vmatprep.subr.mxu0 0.0
        %951 = vmatpush1.msra.mxu0 %v903
        %952 = vmatprep.subr.mxu0 0.0
        %953 = vmatpush1.msra.mxu0 %v904
        %954 = vmatprep.subr.mxu0 0.0
        %955 = vmatpush1.msra.mxu0 %v905
        %956 = vmatprep.subr.mxu0 0.0
        %957 = vmatpush1.msra.mxu0 %v906
        %958 = vmatprep.subr.mxu0 0.0
        %959 = vmatpush1.msra.mxu0 %v907
        %960 = vmatprep.subr.mxu0 0.0
        %961 = vmatpush1.msra.mxu0 %v908
        %962 = vmatprep.subr.mxu0 0.0
        %963 = vmatpush1.msra.mxu0 %v909
        %964 = vmatprep.subr.mxu0 0.0
        %965 = vmatpush1.msra.mxu0 %v910
        %966 = vmatprep.subr.mxu0 0.0
        %967 = vmatpush1.msra.mxu0 %v911
        %968 = vmatprep.subr.mxu0 0.0
        %969 = vmatpush1.msra.mxu0 %v912
        %970 = vmatprep.subr.mxu0 0.0
        %971 = vmatpush1.msra.mxu0 %v913
        %972 = vmatprep.subr.mxu0 0.0
        %973 = vmatpush1.msra.mxu0 %v914
        %974 = vmatprep.subr.mxu0 0.0
        %975 = vmatpush1.msra.mxu0 %v915
        %976 = vmatprep.subr.mxu0 0.0
        %977 = vmatpush1.msra.mxu0 %v916
        %978 = vmatprep.subr.mxu0 0.0
        %979 = vmatpush1.msra.mxu0 %v917
        %980 = vmatprep.subr.mxu0 0.0
        %981 = vmatpush1.msra.mxu0 %v918
        %982 = vmatprep.subr.mxu0 0.0
        %983 = vmatpush1.msra.mxu0 %v919
        %984 = vmatprep.subr.mxu0 0.0
        %985 = vmatpush1.msra.mxu0 %v920
        %986 = vmatprep.subr.mxu0 0.0
        %987 = vmatpush1.msra.mxu0 %v921
        %988 = vmatprep.subr.mxu0 0.0
        %989 = vmatpush1.msra.mxu0 %v922
        %990 = vmatprep.subr.mxu0 0.0
        %991 = vmatpush1.msra.mxu0 %v923
        %992 = vmatprep.subr.mxu0 0.0
        %993 = vmatpush1.msra.mxu0 %v924
        %994 = vmatprep.subr.mxu0 0.0
        %995 = vmatpush1.msra.mxu0 %v925
        %996 = vmatprep.subr.mxu0 0.0
        %997 = vmatpush1.msra.mxu0 %v926
        %998 = vmatprep.mubr.f32.mxu0 %v894
        %999 = vmatmul.mubr.f32.gmra.mrb[0].mxu0 %v893
        %v1000 = vpop.f32.mrb[0].mxu0
        %v1001 = vadd.f32 %v932, %v1000
        %v1002 = vpop.f32.mrb[0].mxu0
        %1003 = vdwg.mxu0
        %v1004 = vmax.f32 %v1001, 0.0
        %1005 = vst [vmem:[%s505] sm:$0xff] %v1004
        %v1006 = vld [vmem:[#allocation10] sm:$0xff]
        %v1007 = vld [vmem:[#allocation10 + $0x8] sm:$0xff]
        %v1008 = vld [vmem:[#allocation10 + $0x10] sm:$0xff]
        %v1009 = vld [vmem:[#allocation10 + $0x18] sm:$0xff]
        %v1010 = vld [vmem:[#allocation10 + $0x20] sm:$0xff]
        %v1011 = vld [vmem:[#allocation10 + $0x28] sm:$0xff]
        %v1012 = vld [vmem:[#allocation10 + $0x30] sm:$0xff]
        %v1013 = vld [vmem:[#allocation10 + $0x38] sm:$0xff]
        %v1014 = vld [vmem:[#allocation10 + $0x40] sm:$0xff]
        %v1015 = vld [vmem:[#allocation10 + $0x48] sm:$0xff]
        %v1016 = vld [vmem:[#allocation10 + $0x50] sm:$0xff]
        %v1017 = vld [vmem:[#allocation10 + $0x58] sm:$0xff]
        %v1018 = vld [vmem:[#allocation10 + $0x60] sm:$0xff]
        %v1019 = vld [vmem:[#allocation10 + $0x68] sm:$0xff]
        %v1020 = vld [vmem:[#allocation10 + $0x70] sm:$0xff]
        %v1021 = vld [vmem:[#allocation10 + $0x78] sm:$0xff]
        %v1022 = vld [vmem:[#allocation10 + $0x80] sm:$0xff]
        %v1023 = vld [vmem:[#allocation10 + $0x88] sm:$0xff]
        %v1024 = vld [vmem:[#allocation10 + $0x90] sm:$0xff]
        %v1025 = vld [vmem:[#allocation10 + $0x98] sm:$0xff]
        %v1026 = vld [vmem:[#allocation10 + $0xa0] sm:$0xff]
        %v1027 = vld [vmem:[#allocation10 + $0xa8] sm:$0xff]
        %v1028 = vld [vmem:[#allocation10 + $0xb0] sm:$0xff]
        %v1029 = vld [vmem:[#allocation10 + $0xb8] sm:$0xff]
        %v1030 = vld [vmem:[#allocation10 + $0xc0] sm:$0xff]
        %v1031 = vld [vmem:[#allocation10 + $0xc8] sm:$0xff]
        %v1032 = vld [vmem:[#allocation10 + $0xd0] sm:$0xff]
        %v1033 = vld [vmem:[#allocation10 + $0xd8] sm:$0xff]
        %v1034 = vld [vmem:[#allocation10 + $0xe0] sm:$0xff]
        %v1035 = vld [vmem:[#allocation10 + $0xe8] sm:$0xff]
        %v1036 = vld [vmem:[#allocation10 + $0xf0] sm:$0xff]
        %v1037 = vld [vmem:[#allocation10 + $0xf8] sm:$0xff]
        %v1038 = vld [vmem:[#allocation10 + $0x100] sm:$0xff]
        %v1039 = vld [vmem:[#allocation10 + $0x108] sm:$0xff]
        %v1040 = vld [vmem:[#allocation10 + $0x110] sm:$0xff]
        %v1041 = vld [vmem:[#allocation10 + $0x118] sm:$0xff]
        %v1042 = vld [vmem:[#allocation10 + $0x120] sm:$0xff]
        %v1043 = vld [vmem:[#allocation10 + $0x128] sm:$0xff]
        %v1044 = vld [vmem:[#allocation10 + $0x130] sm:$0xff]
        %v1045 = vld [vmem:[#allocation10 + $0x138] sm:$0xff]
        %v1046 = vld [vmem:[#allocation10 + $0x140] sm:$0xff]
        %v1047 = vld [vmem:[#allocation10 + $0x148] sm:$0xff]
        %v1048 = vld [vmem:[#allocation10 + $0x150] sm:$0xff]
        %v1049 = vld [vmem:[#allocation10 + $0x158] sm:$0xff]
        %v1050 = vld [vmem:[#allocation10 + $0x160] sm:$0xff]
        %v1051 = vld [vmem:[#allocation10 + $0x168] sm:$0xff]
        %v1052 = vld [vmem:[#allocation10 + $0x170] sm:$0xff]
        %v1053 = vld [vmem:[#allocation10 + $0x178] sm:$0xff]
        %v1054 = vld [vmem:[#allocation10 + $0x180] sm:$0xff]
        %v1055 = vld [vmem:[#allocation10 + $0x188] sm:$0xff]
        %v1056 = vld [vmem:[#allocation10 + $0x190] sm:$0xff]
        %v1057 = vld [vmem:[#allocation10 + $0x198] sm:$0xff]
        %v1058 = vld [vmem:[#allocation10 + $0x1a0] sm:$0xff]
        %v1059 = vld [vmem:[#allocation10 + $0x1a8] sm:$0xff]
        %v1060 = vld [vmem:[#allocation10 + $0x1b0] sm:$0xff]
        %v1061 = vld [vmem:[#allocation10 + $0x1b8] sm:$0xff]
        %v1062 = vld [vmem:[#allocation10 + $0x1c0] sm:$0xff]
        %v1063 = vld [vmem:[#allocation10 + $0x1c8] sm:$0xff]
        %v1064 = vld [vmem:[#allocation10 + $0x1d0] sm:$0xff]
        %v1065 = vld [vmem:[#allocation10 + $0x1d8] sm:$0xff]
        %v1066 = vld [vmem:[#allocation10 + $0x1e0] sm:$0xff]
        %v1067 = vld [vmem:[#allocation10 + $0x1e8] sm:$0xff]
        %v1068 = vld [vmem:[#allocation10 + $0x1f0] sm:$0xff]
        %v1069 = vld [vmem:[#allocation10 + $0x1f8] sm:$0xff]
        %v1070 = vld [vmem:[%s8] sm:$0x3]
        %v1072 = vlaneseq
        %v1073 = vshrl.u32 %v1072, 7
        %v1074 = vsub.s32 0, %v1073
        %v1075 = vrot.slane %v1070, %v1074
        %v1076 = vlaneseq
        %v1077 = vshrl.u32 %v1076, 7
        %v1078 = vsub.s32 1, %v1077
        %v1079 = vrot.slane %v1070, %v1078
        %1082 = vmatprep.subr.mxu0 %v1007
        %1083 = vmatpush1.msra.mxu0 %v1006
        %1084 = vmatprep.subr.mxu0 %v1009
        %1085 = vmatpush1.msra.mxu0 %v1008
        %1086 = vmatprep.subr.mxu0 %v1011
        %1087 = vmatpush1.msra.mxu0 %v1010
        %1088 = vmatprep.subr.mxu0 %v1013
        %1089 = vmatpush1.msra.mxu0 %v1012
        %1090 = vmatprep.subr.mxu0 %v1015
        %1091 = vmatpush1.msra.mxu0 %v1014
        %1092 = vmatprep.subr.mxu0 %v1017
        %1093 = vmatpush1.msra.mxu0 %v1016
        %1094 = vmatprep.subr.mxu0 %v1019
        %1095 = vmatpush1.msra.mxu0 %v1018
        %1096 = vmatprep.subr.mxu0 %v1021
        %1097 = vmatpush1.msra.mxu0 %v1020
        %1098 = vmatprep.subr.mxu0 %v1023
        %1099 = vmatpush1.msra.mxu0 %v1022
        %1100 = vmatprep.subr.mxu0 %v1025
        %1101 = vmatpush1.msra.mxu0 %v1024
        %1102 = vmatprep.subr.mxu0 %v1027
        %1103 = vmatpush1.msra.mxu0 %v1026
        %1104 = vmatprep.subr.mxu0 %v1029
        %1105 = vmatpush1.msra.mxu0 %v1028
        %1106 = vmatprep.subr.mxu0 %v1031
        %1107 = vmatpush1.msra.mxu0 %v1030
        %1108 = vmatprep.subr.mxu0 %v1033
        %1109 = vmatpush1.msra.mxu0 %v1032
        %1110 = vmatprep.subr.mxu0 %v1035
        %1111 = vmatpush1.msra.mxu0 %v1034
        %1112 = vmatprep.subr.mxu0 %v1037
        %1113 = vmatpush1.msra.mxu0 %v1036
        %1114 = vmatprep.subr.mxu0 %v1039
        %1115 = vmatpush1.msra.mxu0 %v1038
        %1116 = vmatprep.subr.mxu0 %v1041
        %1117 = vmatpush1.msra.mxu0 %v1040
        %1118 = vmatprep.subr.mxu0 %v1043
        %1119 = vmatpush1.msra.mxu0 %v1042
        %1120 = vmatprep.subr.mxu0 %v1045
        %1121 = vmatpush1.msra.mxu0 %v1044
        %1122 = vmatprep.subr.mxu0 %v1047
        %1123 = vmatpush1.msra.mxu0 %v1046
        %1124 = vmatprep.subr.mxu0 %v1049
        %1125 = vmatpush1.msra.mxu0 %v1048
        %1126 = vmatprep.subr.mxu0 %v1051
        %1127 = vmatpush1.msra.mxu0 %v1050
        %1128 = vmatprep.subr.mxu0 %v1053
        %1129 = vmatpush1.msra.mxu0 %v1052
        %1130 = vmatprep.subr.mxu0 %v1055
        %1131 = vmatpush1.msra.mxu0 %v1054
        %1132 = vmatprep.subr.mxu0 %v1057
        %1133 = vmatpush1.msra.mxu0 %v1056
        %1134 = vmatprep.subr.mxu0 %v1059
        %1135 = vmatpush1.msra.mxu0 %v1058
        %1136 = vmatprep.subr.mxu0 %v1061
        %1137 = vmatpush1.msra.mxu0 %v1060
        %1138 = vmatprep.subr.mxu0 %v1063
        %1139 = vmatpush1.msra.mxu0 %v1062
        %1140 = vmatprep.subr.mxu0 %v1065
        %1141 = vmatpush1.msra.mxu0 %v1064
        %1142 = vmatprep.subr.mxu0 %v1067
        %1143 = vmatpush1.msra.mxu0 %v1066
        %1144 = vmatprep.subr.mxu0 %v1069
        %1145 = vmatpush1.msra.mxu0 %v1068
        %1146 = vmatprep.mubr.f32.mxu0 %v745
        %1147 = vmatmul.mubr.f32.gmra.mrb[0].mxu0 %v744
        %v1148 = vpop.f32.mrb[0].mxu0
        %v1149 = vadd.f32 %v1075, %v1148
        %v1150 = vpop.f32.mrb[0].mxu0
        %v1151 = vadd.f32 %v1079, %v1150
        %1152 = vdwg.mxu0
        %v1153 = vmax.f32 %v1149, 0.0
        %v1154 = vmax.f32 %v1151, 0.0
        %v1155 = vld [vmem:[#allocation11] sm:$0xff]
        %v1156 = vld [vmem:[#allocation11 + $0x8] sm:$0xff]
        %v1157 = vld [vmem:[#allocation11 + $0x10] sm:$0xff]
        %v1158 = vld [vmem:[#allocation11 + $0x18] sm:$0xff]
        %v1159 = vld [vmem:[#allocation11 + $0x20] sm:$0xff]
        %v1160 = vld [vmem:[#allocation11 + $0x28] sm:$0xff]
        %v1161 = vld [vmem:[#allocation11 + $0x30] sm:$0xff]
        %v1162 = vld [vmem:[#allocation11 + $0x38] sm:$0xff]
        %v1163 = vld [vmem:[#allocation11 + $0x40] sm:$0xff]
        %v1164 = vld [vmem:[#allocation11 + $0x48] sm:$0xff]
        %v1165 = vld [vmem:[#allocation11 + $0x50] sm:$0xff]
        %v1166 = vld [vmem:[#allocation11 + $0x58] sm:$0xff]
        %v1167 = vld [vmem:[#allocation11 + $0x60] sm:$0xff]
        %v1168 = vld [vmem:[#allocation11 + $0x68] sm:$0xff]
        %v1169 = vld [vmem:[#allocation11 + $0x70] sm:$0xff]
        %v1170 = vld [vmem:[#allocation11 + $0x78] sm:$0xff]
        %v1171 = vld [vmem:[#allocation11 + $0x80] sm:$0xff]
        %v1172 = vld [vmem:[#allocation11 + $0x88] sm:$0xff]
        %v1173 = vld [vmem:[#allocation11 + $0x90] sm:$0xff]
        %v1174 = vld [vmem:[#allocation11 + $0x98] sm:$0xff]
        %v1175 = vld [vmem:[#allocation11 + $0xa0] sm:$0xff]
        %v1176 = vld [vmem:[#allocation11 + $0xa8] sm:$0xff]
        %v1177 = vld [vmem:[#allocation11 + $0xb0] sm:$0xff]
        %v1178 = vld [vmem:[#allocation11 + $0xb8] sm:$0xff]
        %v1179 = vld [vmem:[#allocation11 + $0xc0] sm:$0xff]
        %v1180 = vld [vmem:[#allocation11 + $0xc8] sm:$0xff]
        %v1181 = vld [vmem:[#allocation11 + $0xd0] sm:$0xff]
        %v1182 = vld [vmem:[#allocation11 + $0xd8] sm:$0xff]
        %v1183 = vld [vmem:[#allocation11 + $0xe0] sm:$0xff]
        %v1184 = vld [vmem:[#allocation11 + $0xe8] sm:$0xff]
        %v1185 = vld [vmem:[#allocation11 + $0xf0] sm:$0xff]
        %v1186 = vld [vmem:[#allocation11 + $0xf8] sm:$0xff]
        %v1187 = vld [vmem:[#allocation11 + $0x100] sm:$0xff]
        %v1188 = vld [vmem:[#allocation11 + $0x108] sm:$0xff]
        %v1189 = vld [vmem:[#allocation11 + $0x110] sm:$0xff]
        %v1190 = vld [vmem:[#allocation11 + $0x118] sm:$0xff]
        %v1191 = vld [vmem:[#allocation11 + $0x120] sm:$0xff]
        %v1192 = vld [vmem:[#allocation11 + $0x128] sm:$0xff]
        %v1193 = vld [vmem:[#allocation11 + $0x130] sm:$0xff]
        %v1194 = vld [vmem:[#allocation11 + $0x138] sm:$0xff]
        %v1195 = vld [vmem:[#allocation11 + $0x140] sm:$0xff]
        %v1196 = vld [vmem:[#allocation11 + $0x148] sm:$0xff]
        %v1197 = vld [vmem:[#allocation11 + $0x150] sm:$0xff]
        %v1198 = vld [vmem:[#allocation11 + $0x158] sm:$0xff]
        %v1199 = vld [vmem:[#allocation11 + $0x160] sm:$0xff]
        %v1200 = vld [vmem:[#allocation11 + $0x168] sm:$0xff]
        %v1201 = vld [vmem:[#allocation11 + $0x170] sm:$0xff]
        %v1202 = vld [vmem:[#allocation11 + $0x178] sm:$0xff]
        %v1203 = vld [vmem:[#allocation11 + $0x180] sm:$0xff]
        %v1204 = vld [vmem:[#allocation11 + $0x188] sm:$0xff]
        %v1205 = vld [vmem:[#allocation11 + $0x190] sm:$0xff]
        %v1206 = vld [vmem:[#allocation11 + $0x198] sm:$0xff]
        %v1207 = vld [vmem:[#allocation11 + $0x1a0] sm:$0xff]
        %v1208 = vld [vmem:[#allocation11 + $0x1a8] sm:$0xff]
        %v1209 = vld [vmem:[#allocation11 + $0x1b0] sm:$0xff]
        %v1210 = vld [vmem:[#allocation11 + $0x1b8] sm:$0xff]
        %v1211 = vld [vmem:[#allocation11 + $0x1c0] sm:$0xff]
        %v1212 = vld [vmem:[#allocation11 + $0x1c8] sm:$0xff]
        %v1213 = vld [vmem:[#allocation11 + $0x1d0] sm:$0xff]
        %v1214 = vld [vmem:[#allocation11 + $0x1d8] sm:$0xff]
        %v1215 = vld [vmem:[#allocation11 + $0x1e0] sm:$0xff]
        %v1216 = vld [vmem:[#allocation11 + $0x1e8] sm:$0xff]
        %v1217 = vld [vmem:[#allocation11 + $0x1f0] sm:$0xff]
        %v1218 = vld [vmem:[#allocation11 + $0x1f8] sm:$0xff]
        %v1219 = vld [vmem:[%s10] sm:$0x3]
        %v1221 = vlaneseq
        %v1222 = vshrl.u32 %v1221, 7
        %v1223 = vsub.s32 0, %v1222
        %v1224 = vrot.slane %v1219, %v1223
        %v1225 = vlaneseq
        %v1226 = vshrl.u32 %v1225, 7
        %v1227 = vsub.s32 1, %v1226
        %v1228 = vrot.slane %v1219, %v1227
        %1231 = vmatprep.subr.mxu0 %v1156
        %1232 = vmatpush1.msra.mxu0 %v1155
        %1233 = vmatprep.subr.mxu0 %v1158
        %1234 = vmatpush1.msra.mxu0 %v1157
        %1235 = vmatprep.subr.mxu0 %v1160
        %1236 = vmatpush1.msra.mxu0 %v1159
        %1237 = vmatprep.subr.mxu0 %v1162
        %1238 = vmatpush1.msra.mxu0 %v1161
        %1239 = vmatprep.subr.mxu0 %v1164
        %1240 = vmatpush1.msra.mxu0 %v1163
        %1241 = vmatprep.subr.mxu0 %v1166
        %1242 = vmatpush1.msra.mxu0 %v1165
        %1243 = vmatprep.subr.mxu0 %v1168
        %1244 = vmatpush1.msra.mxu0 %v1167
        %1245 = vmatprep.subr.mxu0 %v1170
        %1246 = vmatpush1.msra.mxu0 %v1169
        %1247 = vmatprep.subr.mxu0 %v1172
        %1248 = vmatpush1.msra.mxu0 %v1171
        %1249 = vmatprep.subr.mxu0 %v1174
        %1250 = vmatpush1.msra.mxu0 %v1173
        %1251 = vmatprep.subr.mxu0 %v1176
        %1252 = vmatpush1.msra.mxu0 %v1175
        %1253 = vmatprep.subr.mxu0 %v1178
        %1254 = vmatpush1.msra.mxu0 %v1177
        %1255 = vmatprep.subr.mxu0 %v1180
        %1256 = vmatpush1.msra.mxu0 %v1179
        %1257 = vmatprep.subr.mxu0 %v1182
        %1258 = vmatpush1.msra.mxu0 %v1181
        %1259 = vmatprep.subr.mxu0 %v1184
        %1260 = vmatpush1.msra.mxu0 %v1183
        %1261 = vmatprep.subr.mxu0 %v1186
        %1262 = vmatpush1.msra.mxu0 %v1185
        %1263 = vmatprep.subr.mxu0 %v1188
        %1264 = vmatpush1.msra.mxu0 %v1187
        %1265 = vmatprep.subr.mxu0 %v1190
        %1266 = vmatpush1.msra.mxu0 %v1189
        %1267 = vmatprep.subr.mxu0 %v1192
        %1268 = vmatpush1.msra.mxu0 %v1191
        %1269 = vmatprep.subr.mxu0 %v1194
        %1270 = vmatpush1.msra.mxu0 %v1193
        %1271 = vmatprep.subr.mxu0 %v1196
        %1272 = vmatpush1.msra.mxu0 %v1195
        %1273 = vmatprep.subr.mxu0 %v1198
        %1274 = vmatpush1.msra.mxu0 %v1197
        %1275 = vmatprep.subr.mxu0 %v1200
        %1276 = vmatpush1.msra.mxu0 %v1199
        %1277 = vmatprep.subr.mxu0 %v1202
        %1278 = vmatpush1.msra.mxu0 %v1201
        %1279 = vmatprep.subr.mxu0 %v1204
        %1280 = vmatpush1.msra.mxu0 %v1203
        %1281 = vmatprep.subr.mxu0 %v1206
        %1282 = vmatpush1.msra.mxu0 %v1205
        %1283 = vmatprep.subr.mxu0 %v1208
        %1284 = vmatpush1.msra.mxu0 %v1207
        %1285 = vmatprep.subr.mxu0 %v1210
        %1286 = vmatpush1.msra.mxu0 %v1209
        %1287 = vmatprep.subr.mxu0 %v1212
        %1288 = vmatpush1.msra.mxu0 %v1211
        %1289 = vmatprep.subr.mxu0 %v1214
        %1290 = vmatpush1.msra.mxu0 %v1213
        %1291 = vmatprep.subr.mxu0 %v1216
        %1292 = vmatpush1.msra.mxu0 %v1215
        %1293 = vmatprep.subr.mxu0 %v1218
        %1294 = vmatpush1.msra.mxu0 %v1217
        %1295 = vmatprep.mubr.f32.mxu0 %v1154
        %1296 = vmatmul.mubr.f32.gmra.mrb[0].mxu0 %v1153
        %v1297 = vpop.f32.mrb[0].mxu0
        %v1298 = vadd.f32 %v1224, %v1297
        %v1299 = vpop.f32.mrb[0].mxu0
        %v1300 = vadd.f32 %v1228, %v1299
        %1301 = vdwg.mxu0
        %v1302 = vmax.f32 %v1298, 0.0
        %v1303 = vmax.f32 %v1300, 0.0
        %1304 = vst [vmem:[%s512] sm:$0xff] %v1302
        %1305 = vst [vmem:[%s512 + $0x8] sm:$0xff] %v1303
        %s1306 = sand.u32 %s280, 1
        %s1307 = scalar_lea.sflag [#allocation4], %s1306
        %s1308 = sand.u32 %s280, 1
        %s1309 = smul.addr %s1308, 8
        %s1310 = scalar_lea.vmem [#allocation13], %s1309
        %s1311 = sand.u32 %s306, 1
        %s1312 = scalar_lea.sflag [#allocation15], %s1311
        %s1313 = sand.u32 %s306, 1
        %s1314 = smul.addr %s1313, 16
        %s1315 = scalar_lea.vmem [#allocation14], %s1314
        // Predicated region
        $region89: #{tpu_custom_call.1} parent=63 // pred_check
          %p1316 = pneg %p290
        $region90: #{tpu_custom_call.1} parent=63 // pred_check_branch
          %1318 = sbr.rel (%p1316) target = $region92
        $region91: #{tpu_custom_call.1} parent=63 // pred_region
          %s1320 = ssub.s32 128, 128
          %1321 = vsyncadd %s1307, %s1320
          %s1322 = smul.addr %s36, 128
          %s1323 = scalar_lea.hbm %s11, %s1322
          %s1325 = sshll.u32 %s1310, 4
          %s1326 = int_to_ptr.vmem [resolvable:$true] %s1325
          %1328 = dma.vmem_to_hbm [thread:$0]  %s1326, 128, %s1323, %s1307
        $region92: #{tpu_custom_call.1} parent=63 // pred_fallthru
          _
        // Predicated region
        $region93: #{tpu_custom_call.1} parent=63 // pred_check
          %p1329 = pneg %p316
        $region94: #{tpu_custom_call.1} parent=63 // pred_check_branch
          %1331 = sbr.rel (%p1329) target = $region96
        $region95: #{tpu_custom_call.1} parent=63 // pred_region
          %s1333 = ssub.s32 256, 256
          %1334 = vsyncadd %s1312, %s1333
          %s1335 = smul.addr %s36, 2
          %s1336 = smul.addr %s1335, 128
          %s1337 = scalar_lea.hbm %s12, %s1336
          %s1339 = sshll.u32 %s1315, 4
          %s1340 = int_to_ptr.vmem [resolvable:$true] %s1339
          %1342 = dma.vmem_to_hbm [thread:$0]  %s1340, 256, %s1337, %s1312
        $region96: #{tpu_custom_call.1} parent=63 // pred_fallthru
          _
      $region64: #{tpu_custom_call.1} parent=5 // pred_fallthru
        _
      %p1343 = scmp.le.s32.totalorder 2, %s31
      // Predicated region
      $region97: #{tpu_custom_call.1} parent=5 // pred_check
        %p1344 = pneg %p1343
      $region98: #{tpu_custom_call.1} parent=5 // pred_check_branch
        %1346 = sbr.rel (%p1344) target = $region100
      $region99: #{tpu_custom_call.1} parent=5 // pred_region
        %s1347 = ssub.s32 %s31, 2
        // Predicated region
        $region101: #{tpu_custom_call.1} parent=99 // pred_check
          %p1348 = pneg %p296
        $region102: #{tpu_custom_call.1} parent=99 // pred_check_branch
          %1350 = sbr.rel (%p1348) target = $region104
        $region103: #{tpu_custom_call.1} parent=99 // pred_region
          %s1351 = sand.u32 %s281, 1
          %s1352 = scalar_lea.sflag [#allocation4], %s1351
          %s1353 = sand.u32 %s281, 1
          %s1354 = smul.addr %s1353, 8
          %s1355 = scalar_lea.vmem [#allocation13], %s1354
          %1356 = dma.done %s1352, 128
        $region104: #{tpu_custom_call.1} parent=99 // pred_fallthru
          _
        // Predicated region
        $region105: #{tpu_custom_call.1} parent=99 // pred_check
          %p1357 = pneg %p322
        $region106: #{tpu_custom_call.1} parent=99 // pred_check_branch
          %1359 = sbr.rel (%p1357) target = $region108
        $region107: #{tpu_custom_call.1} parent=99 // pred_region
          %s1360 = sand.u32 %s307, 1
          %s1361 = scalar_lea.sflag [#allocation15], %s1360
          %s1362 = sand.u32 %s307, 1
          %s1363 = smul.addr %s1362, 16
          %s1364 = scalar_lea.vmem [#allocation14], %s1363
          %1365 = dma.done %s1361, 256
        $region108: #{tpu_custom_call.1} parent=99 // pred_fallthru
          _
      $region100: #{tpu_custom_call.1} parent=5 // pred_fallthru
        _
    $region6: #{tpu_custom_call.1} parent=1 // loop_footer
      %s35 = sadd.s32 1, %s31
    $region7: #{tpu_custom_call.1} parent=1 // loop_footer_branch
      %30 = sbr.rel target = $region3
    $region8: #{tpu_custom_call.1} parent=1 // loop_exit
      _
    %1366 = vsyncpa [#allocation3], 1
    %s1367 = scalar_lea.sflag [#allocation3], 1
    %1368 = vsyncpa %s1367, 1
    %1369 = vsyncpa [#allocation6], 1
    %1370 = vsyncpa [#allocation9], 1
    %1371 = vsyncpa [#allocation12], 1
    %1372 = vsyncpa [#allocation4], 1
    %s1373 = scalar_lea.sflag [#allocation4], 1
    %1374 = vsyncpa %s1373, 1
    %1375 = vsyncpa [#allocation15], 1
    %s1376 = scalar_lea.sflag [#allocation15], 1
    %1377 = vsyncpa %s1376, 1

</llo_original>
